<compile_context>
chip_gen: v7x
topology: tpu7x:2x2x1
jax: 0.10.0
libtpu: 0.0.40
codegen_flags: <defaults>
</compile_context>

<pallas_src>
import jax
import jax.numpy as jnp
from jax import lax
from jax.experimental import pallas as pl
from jax.experimental.pallas import tpu as pltpu
import numpy as np

# bf16 MXU operands (f32 accumulation).  Use jnp.float32 for bit-tight fidelity.
MXU_WEIGHT_DTYPE = jnp.bfloat16


def _policy_kernel(pre_ref, whh_ref, w1_ref, b1_ref, w2_ref, b2_ref, out_ref):
    """LSTM recurrence + MLP head in one kernel; all operands resident in VMEM.

    pre_ref: (S, B, 4H) f32 time-major gate pre-activations (embedding/W_ih/bias folded)
    whh_ref: (H, 4H)    recurrent weights (MXU dtype)
    w1_ref:  (H, H)     fc1 weights (MXU dtype);  b1_ref: (1, H) f32
    w2_ref:  (H, O_pad) fc2 weights (MXU dtype);  b2_ref: (1, O_pad) f32
    out_ref: (B, O_pad) f32 logits (lane-dense padded output)
    """
    S, B, four_h = pre_ref.shape
    H = four_h // 4
    mxu_dt = whh_ref.dtype

    # --- Serial recurrence: only h @ W_hh is on the critical path per step. ---
    # NOTE(perf): at B_pad=8 the per-step cost is ~4 MXU result blocks + 5 single-vreg
    # EUP transcendentals; the EUP is likely the binding unit -> batching is ~free.
    def lstm_step(t, carry):
        h, c = carry
        gates = pre_ref[t] + jnp.dot(h.astype(mxu_dt), whh_ref[...],
                                     preferred_element_type=jnp.float32)    # (B, 4H) f32
        # PyTorch gate ordering: input, forget, cell(g), output.
        i = jax.nn.sigmoid(gates[:, 0 * H:1 * H])
        f = jax.nn.sigmoid(gates[:, 1 * H:2 * H])
        g = jnp.tanh(gates[:, 2 * H:3 * H])
        o = jax.nn.sigmoid(gates[:, 3 * H:4 * H])
        c_new = f * c + i * g
        h_new = o * jnp.tanh(c_new)
        return (h_new, c_new)

    h0 = jnp.zeros((B, H), jnp.float32)
    c0 = jnp.zeros((B, H), jnp.float32)
    h_last, _ = lax.fori_loop(0, S, lstm_step, (h0, c0), unroll=True)

    # --- MLP head on last hidden state (f32 accumulation, f32 elementwise). ---
    hid = jnp.maximum(
        jnp.dot(h_last.astype(mxu_dt), w1_ref[...],
                preferred_element_type=jnp.float32) + b1_ref[...],
        0.0)
    out_ref[...] = (jnp.dot(hid.astype(mxu_dt), w2_ref[...],
                            preferred_element_type=jnp.float32) + b2_ref[...])


def prepare_params(params, output_dim, mxu_dtype=MXU_WEIGHT_DTYPE):
    """One-time parameter prep: fused embedding/input-projection table, transposes,
    lane-dense output padding, MXU-dtype casts."""
    H = params["embedding"].shape[1]
    o_pad = pl.cdiv(output_dim, 128) * 128

    # fused_table[v] = embedding[v] @ W_ih.T + (b_ih + b_hh)   -- exact fold of the
    # one-hot-linear embedding followed by the LSTM input projection + both biases.
    fused = (jnp.dot(params["embedding"].astype(jnp.float32),
                     params["w_ih"].T.astype(jnp.float32),
                     precision=lax.Precision.HIGHEST)
             + (params["b_ih"] + params["b_hh"]).astype(jnp.float32))       # (V, 4H)

    w2_t = (jnp.zeros((H, o_pad), jnp.float32)
            .at[:, :output_dim].set(params["w2"].T.astype(jnp.float32)))    # (H, O_pad)
    b2 = (jnp.zeros((1, o_pad), jnp.float32)
          .at[:, :output_dim].set(params["b2"].astype(jnp.float32)))        # (1, O_pad)

    return {
        "fused_table": fused,                                               # (V, 4H) f32
        "whh_t": params["w_hh"].T.astype(mxu_dtype),                        # (H, 4H)
        "w1_t": params["w1"].T.astype(mxu_dtype),                           # (H, H)
        "b1": params["b1"].reshape(1, H).astype(jnp.float32),               # (1, H)
        "w2_t": w2_t.astype(mxu_dtype),                                     # (H, O_pad)
        "b2": b2,                                                           # (1, O_pad)
    }


def policy_network_forward(tokens, prepped, output_dim):
    """Forward pass equivalent to PolicyNetwork.forward (returns logits (B, output_dim))."""
    B, S = tokens.shape

    # Pad the int32 tokens (bytes) to a full f32 sublane tile, not the activations.
    B_pad = ((B + 7) // 8) * 8
    if B_pad != B:
        tokens = jnp.pad(tokens, ((0, B_pad - B), (0, 0)))

    # Gate pre-activations = row gather of the fused table, directly time-major.
    pre = prepped["fused_table"][tokens.T]                     # (S, B_pad, 4H) f32

    o_pad = prepped["w2_t"].shape[1]
    vmem = pl.BlockSpec(memory_space=pltpu.MemorySpace.VMEM)

    logits_pad = pl.pallas_call(
        _policy_kernel,
        out_shape=jax.ShapeDtypeStruct((B_pad, o_pad), jnp.float32),
        in_specs=[vmem] * 6,
        out_specs=vmem,
    )(pre, prepped["whh_t"], prepped["w1_t"], prepped["b1"],
      prepped["w2_t"], prepped["b2"])

    return logits_pad[:B, :output_dim]


def _reference_forward(tokens, params, output_dim):
    """Pure-JAX f32 reference (mirrors torch semantics) for correctness check."""
    H = params["embedding"].shape[1]
    emb = params["embedding"][tokens]                          # (B, S, H)
    B, S, _ = emb.shape
    h = jnp.zeros((B, H), jnp.float32)
    c = jnp.zeros((B, H), jnp.float32)
    for t in range(S):
        x_t = emb[:, t, :]
        gates = (x_t @ params["w_ih"].T + params["b_ih"]
                 + h @ params["w_hh"].T + params["b_hh"])
        i = jax.nn.sigmoid(gates[:, 0 * H:1 * H])
        f = jax.nn.sigmoid(gates[:, 1 * H:2 * H])
        g = jnp.tanh(gates[:, 2 * H:3 * H])
        o = jax.nn.sigmoid(gates[:, 3 * H:4 * H])
        c = f * c + i * g
        h = o * jnp.tanh(c)
    hid = jax.nn.relu(h @ params["w1"].T + params["b1"])
    return hid @ params["w2"].T + params["b2"]


def init_params(key, input_dim, hidden_dim, output_dim):
    """Deterministic synthetic parameters (uniform, PyTorch-like scale)."""
    ks = jax.random.split(key, 9)
    u = lambda k, shape, s: jax.random.uniform(k, shape, jnp.float32, -s, s)
    H = hidden_dim
    return {
        "embedding": u(ks[0], (input_dim, H), 1.0),
        "w_ih": u(ks[1], (4 * H, H), 1.0 / np.sqrt(H)),
        "w_hh": u(ks[2], (4 * H, H), 1.0 / np.sqrt(H)),
        "b_ih": u(ks[3], (4 * H,), 1.0 / np.sqrt(H)),
        "b_hh": u(ks[4], (4 * H,), 1.0 / np.sqrt(H)),
        "w1": u(ks[5], (H, H), 1.0 / np.sqrt(H)),
        "b1": u(ks[6], (H,), 1.0 / np.sqrt(H)),
        "w2": u(ks[7], (output_dim, H), 1.0 / np.sqrt(H)),
        "b2": u(ks[8], (output_dim,), 1.0 / np.sqrt(H)),
    }


if __name__ == "__main__":
    input_dim = 50      # vocab size
    hidden_dim = 128    # matches module constant
    output_dim = 500    # matches module constant
    batch, seq = 2, 8

    key = jax.random.PRNGKey(0)
    k_par, k_tok = jax.random.split(key)
    params = init_params(k_par, input_dim, hidden_dim, output_dim)
    tokens = jax.random.randint(k_tok, (batch, seq), 0, input_dim, dtype=jnp.int32)

    prepped = prepare_params(params, output_dim)              # one-time prep, not per call
    logits = policy_network_forward(tokens, prepped, output_dim)
    logits = jax.block_until_ready(logits)
    assert logits.shape == (batch, output_dim)
    assert logits.dtype == jnp.float32

    ref = _reference_forward(tokens, params, output_dim)
    # Tolerance reflects bf16 MXU operands (f32 accumulation); with
    # MXU_WEIGHT_DTYPE = jnp.float32 this passes at 1e-4.
    np.testing.assert_allclose(np.asarray(logits), np.asarray(ref),
                               rtol=2e-2, atol=2e-2)
    print("KERNEL_OK")
</pallas_src>

<mosaic_0001>
module attributes {stable_mosaic.version = 11 : i64} {
  func.func @_policy_kernel(%arg0: memref<8x8x512xf32, #tpu.memory_space<vmem>>, %arg1: memref<128x512xbf16, #tpu.memory_space<vmem>>, %arg2: memref<128x128xbf16, #tpu.memory_space<vmem>>, %arg3: memref<1x128xf32, #tpu.memory_space<vmem>>, %arg4: memref<128x512xbf16, #tpu.memory_space<vmem>>, %arg5: memref<1x512xf32, #tpu.memory_space<vmem>>, %arg6: memref<8x512xf32, #tpu.memory_space<vmem>>) attributes {dimension_semantics = [], scalar_prefetch = 0 : i64, scratch_operands = 0 : i64, tpu.core_type = #tpu.core_type<tc>} {
    %cst = arith.constant 0.000000e+00 : f32
    %0 = vector.broadcast %cst : f32 to vector<8x128xf32>
    %cst_0 = arith.constant 0.000000e+00 : f32
    %1 = vector.broadcast %cst_0 : f32 to vector<8x128xf32>
    %c0_i32 = arith.constant 0 : i32
    %2 = arith.index_cast %c0_i32 : i32 to index
    %c0 = arith.constant 0 : index
    %c0_1 = arith.constant 0 : index
    %3 = vector.load %arg0[%2, %c0, %c0_1] : memref<8x8x512xf32, #tpu.memory_space<vmem>>, vector<1x8x512xf32>
    %4 = vector.shape_cast %3 : vector<1x8x512xf32> to vector<8x512xf32>
    %5 = arith.truncf %0 : vector<8x128xf32> to vector<8x128xbf16>
    %c0_2 = arith.constant 0 : index
    %c0_3 = arith.constant 0 : index
    %6 = vector.load %arg1[%c0_2, %c0_3] : memref<128x512xbf16, #tpu.memory_space<vmem>>, vector<128x512xbf16>
    %cst_4 = arith.constant dense<0.000000e+00> : vector<8x512xf32>
    %7 = tpu.matmul %5, %6, %cst_4 {dimension_numbers = #tpu.dot_dimension_numbers<[1], [0], [0], [1], [0, 0, 1, 1], [], []>} : vector<8x128xbf16>, vector<128x512xbf16>, vector<8x512xf32> -> vector<8x512xf32>
    %8 = arith.addf %4, %7 : vector<8x512xf32>
    %9 = vector.extract_strided_slice %8 {offsets = [0, 0], sizes = [8, 128], strides = [1, 1]} : vector<8x512xf32> to vector<8x128xf32>
    %10 = arith.negf %9 : vector<8x128xf32>
    %11 = math.exp %10 : vector<8x128xf32>
    %cst_5 = arith.constant 1.000000e+00 : f32
    %12 = vector.broadcast %cst_5 : f32 to vector<8x128xf32>
    %13 = arith.addf %12, %11 : vector<8x128xf32>
    %14 = arith.divf %12, %13 : vector<8x128xf32>
    %15 = vector.extract_strided_slice %8 {offsets = [0, 128], sizes = [8, 128], strides = [1, 1]} : vector<8x512xf32> to vector<8x128xf32>
    %16 = arith.negf %15 : vector<8x128xf32>
    %17 = math.exp %16 : vector<8x128xf32>
    %cst_6 = arith.constant 1.000000e+00 : f32
    %18 = vector.broadcast %cst_6 : f32 to vector<8x128xf32>
    %19 = arith.addf %18, %17 : vector<8x128xf32>
    %20 = arith.divf %18, %19 : vector<8x128xf32>
    %21 = vector.extract_strided_slice %8 {offsets = [0, 256], sizes = [8, 128], strides = [1, 1]} : vector<8x512xf32> to vector<8x128xf32>
    %22 = math.tanh %21 : vector<8x128xf32>
    %23 = vector.extract_strided_slice %8 {offsets = [0, 384], sizes = [8, 128], strides = [1, 1]} : vector<8x512xf32> to vector<8x128xf32>
    %24 = arith.negf %23 : vector<8x128xf32>
    %25 = math.exp %24 : vector<8x128xf32>
    %cst_7 = arith.constant 1.000000e+00 : f32
    %26 = vector.broadcast %cst_7 : f32 to vector<8x128xf32>
    %27 = arith.addf %26, %25 : vector<8x128xf32>
    %28 = arith.divf %26, %27 : vector<8x128xf32>
    %29 = arith.mulf %20, %1 : vector<8x128xf32>
    %30 = arith.mulf %14, %22 : vector<8x128xf32>
    %31 = arith.addf %29, %30 : vector<8x128xf32>
    %32 = math.tanh %31 : vector<8x128xf32>
    %33 = arith.mulf %28, %32 : vector<8x128xf32>
    %c1_i32 = arith.constant 1 : i32
    %34 = arith.index_cast %c1_i32 : i32 to index
    %c0_8 = arith.constant 0 : index
    %c0_9 = arith.constant 0 : index
    %35 = vector.load %arg0[%34, %c0_8, %c0_9] : memref<8x8x512xf32, #tpu.memory_space<vmem>>, vector<1x8x512xf32>
    %36 = vector.shape_cast %35 : vector<1x8x512xf32> to vector<8x512xf32>
    %37 = arith.truncf %33 : vector<8x128xf32> to vector<8x128xbf16>
    %c0_10 = arith.constant 0 : index
    %c0_11 = arith.constant 0 : index
    %38 = vector.load %arg1[%c0_10, %c0_11] : memref<128x512xbf16, #tpu.memory_space<vmem>>, vector<128x512xbf16>
    %cst_12 = arith.constant dense<0.000000e+00> : vector<8x512xf32>
    %39 = tpu.matmul %37, %38, %cst_12 {dimension_numbers = #tpu.dot_dimension_numbers<[1], [0], [0], [1], [0, 0, 1, 1], [], []>} : vector<8x128xbf16>, vector<128x512xbf16>, vector<8x512xf32> -> vector<8x512xf32>
    %40 = arith.addf %36, %39 : vector<8x512xf32>
    %41 = vector.extract_strided_slice %40 {offsets = [0, 0], sizes = [8, 128], strides = [1, 1]} : vector<8x512xf32> to vector<8x128xf32>
    %42 = arith.negf %41 : vector<8x128xf32>
    %43 = math.exp %42 : vector<8x128xf32>
    %cst_13 = arith.constant 1.000000e+00 : f32
    %44 = vector.broadcast %cst_13 : f32 to vector<8x128xf32>
    %45 = arith.addf %44, %43 : vector<8x128xf32>
    %46 = arith.divf %44, %45 : vector<8x128xf32>
    %47 = vector.extract_strided_slice %40 {offsets = [0, 128], sizes = [8, 128], strides = [1, 1]} : vector<8x512xf32> to vector<8x128xf32>
    %48 = arith.negf %47 : vector<8x128xf32>
    %49 = math.exp %48 : vector<8x128xf32>
    %cst_14 = arith.constant 1.000000e+00 : f32
    %50 = vector.broadcast %cst_14 : f32 to vector<8x128xf32>
    %51 = arith.addf %50, %49 : vector<8x128xf32>
    %52 = arith.divf %50, %51 : vector<8x128xf32>
    %53 = vector.extract_strided_slice %40 {offsets = [0, 256], sizes = [8, 128], strides = [1, 1]} : vector<8x512xf32> to vector<8x128xf32>
    %54 = math.tanh %53 : vector<8x128xf32>
    %55 = vector.extract_strided_slice %40 {offsets = [0, 384], sizes = [8, 128], strides = [1, 1]} : vector<8x512xf32> to vector<8x128xf32>
    %56 = arith.negf %55 : vector<8x128xf32>
    %57 = math.exp %56 : vector<8x128xf32>
    %cst_15 = arith.constant 1.000000e+00 : f32
    %58 = vector.broadcast %cst_15 : f32 to vector<8x128xf32>
    %59 = arith.addf %58, %57 : vector<8x128xf32>
    %60 = arith.divf %58, %59 : vector<8x128xf32>
    %61 = arith.mulf %52, %31 : vector<8x128xf32>
    %62 = arith.mulf %46, %54 : vector<8x128xf32>
    %63 = arith.addf %61, %62 : vector<8x128xf32>
    %64 = math.tanh %63 : vector<8x128xf32>
    %65 = arith.mulf %60, %64 : vector<8x128xf32>
    %c2_i32 = arith.constant 2 : i32
    %66 = arith.index_cast %c2_i32 : i32 to index
    %c0_16 = arith.constant 0 : index
    %c0_17 = arith.constant 0 : index
    %67 = vector.load %arg0[%66, %c0_16, %c0_17] : memref<8x8x512xf32, #tpu.memory_space<vmem>>, vector<1x8x512xf32>
    %68 = vector.shape_cast %67 : vector<1x8x512xf32> to vector<8x512xf32>
    %69 = arith.truncf %65 : vector<8x128xf32> to vector<8x128xbf16>
    %c0_18 = arith.constant 0 : index
    %c0_19 = arith.constant 0 : index
    %70 = vector.load %arg1[%c0_18, %c0_19] : memref<128x512xbf16, #tpu.memory_space<vmem>>, vector<128x512xbf16>
    %cst_20 = arith.constant dense<0.000000e+00> : vector<8x512xf32>
    %71 = tpu.matmul %69, %70, %cst_20 {dimension_numbers = #tpu.dot_dimension_numbers<[1], [0], [0], [1], [0, 0, 1, 1], [], []>} : vector<8x128xbf16>, vector<128x512xbf16>, vector<8x512xf32> -> vector<8x512xf32>
    %72 = arith.addf %68, %71 : vector<8x512xf32>
    %73 = vector.extract_strided_slice %72 {offsets = [0, 0], sizes = [8, 128], strides = [1, 1]} : vector<8x512xf32> to vector<8x128xf32>
    %74 = arith.negf %73 : vector<8x128xf32>
    %75 = math.exp %74 : vector<8x128xf32>
    %cst_21 = arith.constant 1.000000e+00 : f32
    %76 = vector.broadcast %cst_21 : f32 to vector<8x128xf32>
    %77 = arith.addf %76, %75 : vector<8x128xf32>
    %78 = arith.divf %76, %77 : vector<8x128xf32>
    %79 = vector.extract_strided_slice %72 {offsets = [0, 128], sizes = [8, 128], strides = [1, 1]} : vector<8x512xf32> to vector<8x128xf32>
    %80 = arith.negf %79 : vector<8x128xf32>
    %81 = math.exp %80 : vector<8x128xf32>
    %cst_22 = arith.constant 1.000000e+00 : f32
    %82 = vector.broadcast %cst_22 : f32 to vector<8x128xf32>
    %83 = arith.addf %82, %81 : vector<8x128xf32>
    %84 = arith.divf %82, %83 : vector<8x128xf32>
    %85 = vector.extract_strided_slice %72 {offsets = [0, 256], sizes = [8, 128], strides = [1, 1]} : vector<8x512xf32> to vector<8x128xf32>
    %86 = math.tanh %85 : vector<8x128xf32>
    %87 = vector.extract_strided_slice %72 {offsets = [0, 384], sizes = [8, 128], strides = [1, 1]} : vector<8x512xf32> to vector<8x128xf32>
    %88 = arith.negf %87 : vector<8x128xf32>
    %89 = math.exp %88 : vector<8x128xf32>
    %cst_23 = arith.constant 1.000000e+00 : f32
    %90 = vector.broadcast %cst_23 : f32 to vector<8x128xf32>
    %91 = arith.addf %90, %89 : vector<8x128xf32>
    %92 = arith.divf %90, %91 : vector<8x128xf32>
    %93 = arith.mulf %84, %63 : vector<8x128xf32>
    %94 = arith.mulf %78, %86 : vector<8x128xf32>
    %95 = arith.addf %93, %94 : vector<8x128xf32>
    %96 = math.tanh %95 : vector<8x128xf32>
    %97 = arith.mulf %92, %96 : vector<8x128xf32>
    %c3_i32 = arith.constant 3 : i32
    %98 = arith.index_cast %c3_i32 : i32 to index
    %c0_24 = arith.constant 0 : index
    %c0_25 = arith.constant 0 : index
    %99 = vector.load %arg0[%98, %c0_24, %c0_25] : memref<8x8x512xf32, #tpu.memory_space<vmem>>, vector<1x8x512xf32>
    %100 = vector.shape_cast %99 : vector<1x8x512xf32> to vector<8x512xf32>
    %101 = arith.truncf %97 : vector<8x128xf32> to vector<8x128xbf16>
    %c0_26 = arith.constant 0 : index
    %c0_27 = arith.constant 0 : index
    %102 = vector.load %arg1[%c0_26, %c0_27] : memref<128x512xbf16, #tpu.memory_space<vmem>>, vector<128x512xbf16>
    %cst_28 = arith.constant dense<0.000000e+00> : vector<8x512xf32>
    %103 = tpu.matmul %101, %102, %cst_28 {dimension_numbers = #tpu.dot_dimension_numbers<[1], [0], [0], [1], [0, 0, 1, 1], [], []>} : vector<8x128xbf16>, vector<128x512xbf16>, vector<8x512xf32> -> vector<8x512xf32>
    %104 = arith.addf %100, %103 : vector<8x512xf32>
    %105 = vector.extract_strided_slice %104 {offsets = [0, 0], sizes = [8, 128], strides = [1, 1]} : vector<8x512xf32> to vector<8x128xf32>
    %106 = arith.negf %105 : vector<8x128xf32>
    %107 = math.exp %106 : vector<8x128xf32>
    %cst_29 = arith.constant 1.000000e+00 : f32
    %108 = vector.broadcast %cst_29 : f32 to vector<8x128xf32>
    %109 = arith.addf %108, %107 : vector<8x128xf32>
    %110 = arith.divf %108, %109 : vector<8x128xf32>
    %111 = vector.extract_strided_slice %104 {offsets = [0, 128], sizes = [8, 128], strides = [1, 1]} : vector<8x512xf32> to vector<8x128xf32>
    %112 = arith.negf %111 : vector<8x128xf32>
    %113 = math.exp %112 : vector<8x128xf32>
    %cst_30 = arith.constant 1.000000e+00 : f32
    %114 = vector.broadcast %cst_30 : f32 to vector<8x128xf32>
    %115 = arith.addf %114, %113 : vector<8x128xf32>
    %116 = arith.divf %114, %115 : vector<8x128xf32>
    %117 = vector.extract_strided_slice %104 {offsets = [0, 256], sizes = [8, 128], strides = [1, 1]} : vector<8x512xf32> to vector<8x128xf32>
    %118 = math.tanh %117 : vector<8x128xf32>
    %119 = vector.extract_strided_slice %104 {offsets = [0, 384], sizes = [8, 128], strides = [1, 1]} : vector<8x512xf32> to vector<8x128xf32>
    %120 = arith.negf %119 : vector<8x128xf32>
    %121 = math.exp %120 : vector<8x128xf32>
    %cst_31 = arith.constant 1.000000e+00 : f32
    %122 = vector.broadcast %cst_31 : f32 to vector<8x128xf32>
    %123 = arith.addf %122, %121 : vector<8x128xf32>
    %124 = arith.divf %122, %123 : vector<8x128xf32>
    %125 = arith.mulf %116, %95 : vector<8x128xf32>
    %126 = arith.mulf %110, %118 : vector<8x128xf32>
    %127 = arith.addf %125, %126 : vector<8x128xf32>
    %128 = math.tanh %127 : vector<8x128xf32>
    %129 = arith.mulf %124, %128 : vector<8x128xf32>
    %c4_i32 = arith.constant 4 : i32
    %130 = arith.index_cast %c4_i32 : i32 to index
    %c0_32 = arith.constant 0 : index
    %c0_33 = arith.constant 0 : index
    %131 = vector.load %arg0[%130, %c0_32, %c0_33] : memref<8x8x512xf32, #tpu.memory_space<vmem>>, vector<1x8x512xf32>
    %132 = vector.shape_cast %131 : vector<1x8x512xf32> to vector<8x512xf32>
    %133 = arith.truncf %129 : vector<8x128xf32> to vector<8x128xbf16>
    %c0_34 = arith.constant 0 : index
    %c0_35 = arith.constant 0 : index
    %134 = vector.load %arg1[%c0_34, %c0_35] : memref<128x512xbf16, #tpu.memory_space<vmem>>, vector<128x512xbf16>
    %cst_36 = arith.constant dense<0.000000e+00> : vector<8x512xf32>
    %135 = tpu.matmul %133, %134, %cst_36 {dimension_numbers = #tpu.dot_dimension_numbers<[1], [0], [0], [1], [0, 0, 1, 1], [], []>} : vector<8x128xbf16>, vector<128x512xbf16>, vector<8x512xf32> -> vector<8x512xf32>
    %136 = arith.addf %132, %135 : vector<8x512xf32>
    %137 = vector.extract_strided_slice %136 {offsets = [0, 0], sizes = [8, 128], strides = [1, 1]} : vector<8x512xf32> to vector<8x128xf32>
    %138 = arith.negf %137 : vector<8x128xf32>
    %139 = math.exp %138 : vector<8x128xf32>
    %cst_37 = arith.constant 1.000000e+00 : f32
    %140 = vector.broadcast %cst_37 : f32 to vector<8x128xf32>
    %141 = arith.addf %140, %139 : vector<8x128xf32>
    %142 = arith.divf %140, %141 : vector<8x128xf32>
    %143 = vector.extract_strided_slice %136 {offsets = [0, 128], sizes = [8, 128], strides = [1, 1]} : vector<8x512xf32> to vector<8x128xf32>
    %144 = arith.negf %143 : vector<8x128xf32>
    %145 = math.exp %144 : vector<8x128xf32>
    %cst_38 = arith.constant 1.000000e+00 : f32
    %146 = vector.broadcast %cst_38 : f32 to vector<8x128xf32>
    %147 = arith.addf %146, %145 : vector<8x128xf32>
    %148 = arith.divf %146, %147 : vector<8x128xf32>
    %149 = vector.extract_strided_slice %136 {offsets = [0, 256], sizes = [8, 128], strides = [1, 1]} : vector<8x512xf32> to vector<8x128xf32>
    %150 = math.tanh %149 : vector<8x128xf32>
    %151 = vector.extract_strided_slice %136 {offsets = [0, 384], sizes = [8, 128], strides = [1, 1]} : vector<8x512xf32> to vector<8x128xf32>
    %152 = arith.negf %151 : vector<8x128xf32>
    %153 = math.exp %152 : vector<8x128xf32>
    %cst_39 = arith.constant 1.000000e+00 : f32
    %154 = vector.broadcast %cst_39 : f32 to vector<8x128xf32>
    %155 = arith.addf %154, %153 : vector<8x128xf32>
    %156 = arith.divf %154, %155 : vector<8x128xf32>
    %157 = arith.mulf %148, %127 : vector<8x128xf32>
    %158 = arith.mulf %142, %150 : vector<8x128xf32>
    %159 = arith.addf %157, %158 : vector<8x128xf32>
    %160 = math.tanh %159 : vector<8x128xf32>
    %161 = arith.mulf %156, %160 : vector<8x128xf32>
    %c5_i32 = arith.constant 5 : i32
    %162 = arith.index_cast %c5_i32 : i32 to index
    %c0_40 = arith.constant 0 : index
    %c0_41 = arith.constant 0 : index
    %163 = vector.load %arg0[%162, %c0_40, %c0_41] : memref<8x8x512xf32, #tpu.memory_space<vmem>>, vector<1x8x512xf32>
    %164 = vector.shape_cast %163 : vector<1x8x512xf32> to vector<8x512xf32>
    %165 = arith.truncf %161 : vector<8x128xf32> to vector<8x128xbf16>
    %c0_42 = arith.constant 0 : index
    %c0_43 = arith.constant 0 : index
    %166 = vector.load %arg1[%c0_42, %c0_43] : memref<128x512xbf16, #tpu.memory_space<vmem>>, vector<128x512xbf16>
    %cst_44 = arith.constant dense<0.000000e+00> : vector<8x512xf32>
    %167 = tpu.matmul %165, %166, %cst_44 {dimension_numbers = #tpu.dot_dimension_numbers<[1], [0], [0], [1], [0, 0, 1, 1], [], []>} : vector<8x128xbf16>, vector<128x512xbf16>, vector<8x512xf32> -> vector<8x512xf32>
    %168 = arith.addf %164, %167 : vector<8x512xf32>
    %169 = vector.extract_strided_slice %168 {offsets = [0, 0], sizes = [8, 128], strides = [1, 1]} : vector<8x512xf32> to vector<8x128xf32>
    %170 = arith.negf %169 : vector<8x128xf32>
    %171 = math.exp %170 : vector<8x128xf32>
    %cst_45 = arith.constant 1.000000e+00 : f32
    %172 = vector.broadcast %cst_45 : f32 to vector<8x128xf32>
    %173 = arith.addf %172, %171 : vector<8x128xf32>
    %174 = arith.divf %172, %173 : vector<8x128xf32>
    %175 = vector.extract_strided_slice %168 {offsets = [0, 128], sizes = [8, 128], strides = [1, 1]} : vector<8x512xf32> to vector<8x128xf32>
    %176 = arith.negf %175 : vector<8x128xf32>
    %177 = math.exp %176 : vector<8x128xf32>
    %cst_46 = arith.constant 1.000000e+00 : f32
    %178 = vector.broadcast %cst_46 : f32 to vector<8x128xf32>
    %179 = arith.addf %178, %177 : vector<8x128xf32>
    %180 = arith.divf %178, %179 : vector<8x128xf32>
    %181 = vector.extract_strided_slice %168 {offsets = [0, 256], sizes = [8, 128], strides = [1, 1]} : vector<8x512xf32> to vector<8x128xf32>
    %182 = math.tanh %181 : vector<8x128xf32>
    %183 = vector.extract_strided_slice %168 {offsets = [0, 384], sizes = [8, 128], strides = [1, 1]} : vector<8x512xf32> to vector<8x128xf32>
    %184 = arith.negf %183 : vector<8x128xf32>
    %185 = math.exp %184 : vector<8x128xf32>
    %cst_47 = arith.constant 1.000000e+00 : f32
    %186 = vector.broadcast %cst_47 : f32 to vector<8x128xf32>
    %187 = arith.addf %186, %185 : vector<8x128xf32>
    %188 = arith.divf %186, %187 : vector<8x128xf32>
    %189 = arith.mulf %180, %159 : vector<8x128xf32>
    %190 = arith.mulf %174, %182 : vector<8x128xf32>
    %191 = arith.addf %189, %190 : vector<8x128xf32>
    %192 = math.tanh %191 : vector<8x128xf32>
    %193 = arith.mulf %188, %192 : vector<8x128xf32>
    %c6_i32 = arith.constant 6 : i32
    %194 = arith.index_cast %c6_i32 : i32 to index
    %c0_48 = arith.constant 0 : index
    %c0_49 = arith.constant 0 : index
    %195 = vector.load %arg0[%194, %c0_48, %c0_49] : memref<8x8x512xf32, #tpu.memory_space<vmem>>, vector<1x8x512xf32>
    %196 = vector.shape_cast %195 : vector<1x8x512xf32> to vector<8x512xf32>
    %197 = arith.truncf %193 : vector<8x128xf32> to vector<8x128xbf16>
    %c0_50 = arith.constant 0 : index
    %c0_51 = arith.constant 0 : index
    %198 = vector.load %arg1[%c0_50, %c0_51] : memref<128x512xbf16, #tpu.memory_space<vmem>>, vector<128x512xbf16>
    %cst_52 = arith.constant dense<0.000000e+00> : vector<8x512xf32>
    %199 = tpu.matmul %197, %198, %cst_52 {dimension_numbers = #tpu.dot_dimension_numbers<[1], [0], [0], [1], [0, 0, 1, 1], [], []>} : vector<8x128xbf16>, vector<128x512xbf16>, vector<8x512xf32> -> vector<8x512xf32>
    %200 = arith.addf %196, %199 : vector<8x512xf32>
    %201 = vector.extract_strided_slice %200 {offsets = [0, 0], sizes = [8, 128], strides = [1, 1]} : vector<8x512xf32> to vector<8x128xf32>
    %202 = arith.negf %201 : vector<8x128xf32>
    %203 = math.exp %202 : vector<8x128xf32>
    %cst_53 = arith.constant 1.000000e+00 : f32
    %204 = vector.broadcast %cst_53 : f32 to vector<8x128xf32>
    %205 = arith.addf %204, %203 : vector<8x128xf32>
    %206 = arith.divf %204, %205 : vector<8x128xf32>
    %207 = vector.extract_strided_slice %200 {offsets = [0, 128], sizes = [8, 128], strides = [1, 1]} : vector<8x512xf32> to vector<8x128xf32>
    %208 = arith.negf %207 : vector<8x128xf32>
    %209 = math.exp %208 : vector<8x128xf32>
    %cst_54 = arith.constant 1.000000e+00 : f32
    %210 = vector.broadcast %cst_54 : f32 to vector<8x128xf32>
    %211 = arith.addf %210, %209 : vector<8x128xf32>
    %212 = arith.divf %210, %211 : vector<8x128xf32>
    %213 = vector.extract_strided_slice %200 {offsets = [0, 256], sizes = [8, 128], strides = [1, 1]} : vector<8x512xf32> to vector<8x128xf32>
    %214 = math.tanh %213 : vector<8x128xf32>
    %215 = vector.extract_strided_slice %200 {offsets = [0, 384], sizes = [8, 128], strides = [1, 1]} : vector<8x512xf32> to vector<8x128xf32>
    %216 = arith.negf %215 : vector<8x128xf32>
    %217 = math.exp %216 : vector<8x128xf32>
    %cst_55 = arith.constant 1.000000e+00 : f32
    %218 = vector.broadcast %cst_55 : f32 to vector<8x128xf32>
    %219 = arith.addf %218, %217 : vector<8x128xf32>
    %220 = arith.divf %218, %219 : vector<8x128xf32>
    %221 = arith.mulf %212, %191 : vector<8x128xf32>
    %222 = arith.mulf %206, %214 : vector<8x128xf32>
    %223 = arith.addf %221, %222 : vector<8x128xf32>
    %224 = math.tanh %223 : vector<8x128xf32>
    %225 = arith.mulf %220, %224 : vector<8x128xf32>
    %c7_i32 = arith.constant 7 : i32
    %226 = arith.index_cast %c7_i32 : i32 to index
    %c0_56 = arith.constant 0 : index
    %c0_57 = arith.constant 0 : index
    %227 = vector.load %arg0[%226, %c0_56, %c0_57] : memref<8x8x512xf32, #tpu.memory_space<vmem>>, vector<1x8x512xf32>
    %228 = vector.shape_cast %227 : vector<1x8x512xf32> to vector<8x512xf32>
    %229 = arith.truncf %225 : vector<8x128xf32> to vector<8x128xbf16>
    %c0_58 = arith.constant 0 : index
    %c0_59 = arith.constant 0 : index
    %230 = vector.load %arg1[%c0_58, %c0_59] : memref<128x512xbf16, #tpu.memory_space<vmem>>, vector<128x512xbf16>
    %cst_60 = arith.constant dense<0.000000e+00> : vector<8x512xf32>
    %231 = tpu.matmul %229, %230, %cst_60 {dimension_numbers = #tpu.dot_dimension_numbers<[1], [0], [0], [1], [0, 0, 1, 1], [], []>} : vector<8x128xbf16>, vector<128x512xbf16>, vector<8x512xf32> -> vector<8x512xf32>
    %232 = arith.addf %228, %231 : vector<8x512xf32>
    %233 = vector.extract_strided_slice %232 {offsets = [0, 0], sizes = [8, 128], strides = [1, 1]} : vector<8x512xf32> to vector<8x128xf32>
    %234 = arith.negf %233 : vector<8x128xf32>
    %235 = math.exp %234 : vector<8x128xf32>
    %cst_61 = arith.constant 1.000000e+00 : f32
    %236 = vector.broadcast %cst_61 : f32 to vector<8x128xf32>
    %237 = arith.addf %236, %235 : vector<8x128xf32>
    %238 = arith.divf %236, %237 : vector<8x128xf32>
    %239 = vector.extract_strided_slice %232 {offsets = [0, 128], sizes = [8, 128], strides = [1, 1]} : vector<8x512xf32> to vector<8x128xf32>
    %240 = arith.negf %239 : vector<8x128xf32>
    %241 = math.exp %240 : vector<8x128xf32>
    %cst_62 = arith.constant 1.000000e+00 : f32
    %242 = vector.broadcast %cst_62 : f32 to vector<8x128xf32>
    %243 = arith.addf %242, %241 : vector<8x128xf32>
    %244 = arith.divf %242, %243 : vector<8x128xf32>
    %245 = vector.extract_strided_slice %232 {offsets = [0, 256], sizes = [8, 128], strides = [1, 1]} : vector<8x512xf32> to vector<8x128xf32>
    %246 = math.tanh %245 : vector<8x128xf32>
    %247 = vector.extract_strided_slice %232 {offsets = [0, 384], sizes = [8, 128], strides = [1, 1]} : vector<8x512xf32> to vector<8x128xf32>
    %248 = arith.negf %247 : vector<8x128xf32>
    %249 = math.exp %248 : vector<8x128xf32>
    %cst_63 = arith.constant 1.000000e+00 : f32
    %250 = vector.broadcast %cst_63 : f32 to vector<8x128xf32>
    %251 = arith.addf %250, %249 : vector<8x128xf32>
    %252 = arith.divf %250, %251 : vector<8x128xf32>
    %253 = arith.mulf %244, %223 : vector<8x128xf32>
    %254 = arith.mulf %238, %246 : vector<8x128xf32>
    %255 = arith.addf %253, %254 : vector<8x128xf32>
    %256 = math.tanh %255 : vector<8x128xf32>
    %257 = arith.mulf %252, %256 : vector<8x128xf32>
    %c8_i32 = arith.constant 8 : i32
    %258 = arith.truncf %257 : vector<8x128xf32> to vector<8x128xbf16>
    %c0_64 = arith.constant 0 : index
    %c0_65 = arith.constant 0 : index
    %259 = vector.load %arg2[%c0_64, %c0_65] : memref<128x128xbf16, #tpu.memory_space<vmem>>, vector<128x128xbf16>
    %cst_66 = arith.constant dense<0.000000e+00> : vector<8x128xf32>
    %260 = tpu.matmul %258, %259, %cst_66 {dimension_numbers = #tpu.dot_dimension_numbers<[1], [0], [0], [1], [0, 0, 1, 1], [], []>} : vector<8x128xbf16>, vector<128x128xbf16>, vector<8x128xf32> -> vector<8x128xf32>
    %c0_67 = arith.constant 0 : index
    %c0_68 = arith.constant 0 : index
    %261 = vector.load %arg3[%c0_67, %c0_68] : memref<1x128xf32, #tpu.memory_space<vmem>>, vector<1x128xf32>
    %262 = vector.broadcast %261 : vector<1x128xf32> to vector<8x128xf32>
    %263 = arith.addf %260, %262 : vector<8x128xf32>
    %cst_69 = arith.constant 0.000000e+00 : f32
    %264 = vector.broadcast %cst_69 : f32 to vector<8x128xf32>
    %265 = arith.maximumf %263, %264 : vector<8x128xf32>
    %266 = arith.truncf %265 : vector<8x128xf32> to vector<8x128xbf16>
    %c0_70 = arith.constant 0 : index
    %c0_71 = arith.constant 0 : index
    %267 = vector.load %arg4[%c0_70, %c0_71] : memref<128x512xbf16, #tpu.memory_space<vmem>>, vector<128x512xbf16>
    %cst_72 = arith.constant dense<0.000000e+00> : vector<8x512xf32>
    %268 = tpu.matmul %266, %267, %cst_72 {dimension_numbers = #tpu.dot_dimension_numbers<[1], [0], [0], [1], [0, 0, 1, 1], [], []>} : vector<8x128xbf16>, vector<128x512xbf16>, vector<8x512xf32> -> vector<8x512xf32>
    %c0_73 = arith.constant 0 : index
    %c0_74 = arith.constant 0 : index
    %269 = vector.load %arg5[%c0_73, %c0_74] : memref<1x512xf32, #tpu.memory_space<vmem>>, vector<1x512xf32>
    %270 = vector.broadcast %269 : vector<1x512xf32> to vector<8x512xf32>
    %271 = arith.addf %268, %270 : vector<8x512xf32>
    %c0_75 = arith.constant 0 : index
    %c0_76 = arith.constant 0 : index
    %272 = vector.load %arg6[%c0_75, %c0_76] : memref<8x512xf32, #tpu.memory_space<vmem>>, vector<8x512xf32>
    tpu.vector_store %arg6[%c0_75, %c0_76], %271 {strides = array<i32>} : memref<8x512xf32, #tpu.memory_space<vmem>>, vector<8x512xf32>,
    return
  }
}

</mosaic_0001>

<llo_original>
// kernel: tpu_custom_call.1
$region0: #{tpu_custom_call.1}
  #allocation0 [shape = 'u32[]', space=smem, size = 0x4, offset = 0x4, fixed_abs, tag = 'smem constant byte address 0x4 - core index']
  #allocation1 [shape = 'u32[144,128]{1,0:T(1,128)}', space=vmem, size = 0x12000, scoped, tag = 'internal scratch']
  %s0 = inlined_call_operand.hbm [shape: f32[8,8,512], index: 0, kind: input, shape index: {}]
  %s1 = inlined_call_operand.hbm [shape: bf16[128,512], index: 1, kind: input, shape index: {}]
  %s2 = inlined_call_operand.hbm [shape: bf16[128,128], index: 2, kind: input, shape index: {}]
  %s3 = inlined_call_operand.vmem [shape: f32[1,128], index: 3, kind: input, shape index: {}]
  %s4 = inlined_call_operand.hbm [shape: bf16[128,512], index: 4, kind: input, shape index: {}]
  %s5 = inlined_call_operand.vmem [shape: f32[1,512], index: 5, kind: input, shape index: {}]
  %s6 = inlined_call_operand.hbm [shape: f32[8,512], index: 6, kind: output, shape index: {}]
  %s7 = sld [smem:[#allocation0]]
  $region50: #{tpu_custom_call.1} parent=0
    _
  %s9 = ssub.s32 1, %s7
  %s10 = scalar_select 0, %s9, %s7
  $region1: #{tpu_custom_call.1} parent=0
    #allocation2 [shape = 'u8[131072]{0}', space=vmem, size = 0x20000, scoped, tag = 'input window, operand 0, single buffered']
    #allocation3 [shape = 's32[1]{0}', space=sflag, size = 0x4, scoped, tag = 'scoped memory for tpu_custom_call.1']
    #allocation4 [shape = 's32[1]{0}', space=sflag, size = 0x4, scoped, tag = 'scoped memory for tpu_custom_call.1']
    #allocation5 [shape = 'u8[131072]{0}', space=vmem, size = 0x20000, scoped, tag = 'input window, operand 1, single buffered']
    #allocation6 [shape = 's32[1]{0}', space=sflag, size = 0x4, scoped, tag = 'scoped memory for tpu_custom_call.1']
    #allocation7 [shape = 'u8[32768]{0}', space=vmem, size = 0x8000, scoped, tag = 'input window, operand 2, single buffered']
    #allocation8 [shape = 'u8[131072]{0}', space=vmem, size = 0x20000, scoped, tag = 'input window, operand 4, single buffered']
    #allocation9 [shape = 's32[1]{0}', space=sflag, size = 0x4, scoped, tag = 'scoped memory for tpu_custom_call.1']
    #allocation10 [shape = 'u8[16384]{0}', space=vmem, size = 0x4000, scoped, tag = 'output window, operand 0, single buffered']
    %11 = vsyncpa [#allocation3], 0
    %12 = vsyncpa [#allocation6], 0
    %13 = vsyncpa [#allocation9], 0
    %14 = vsyncpa [#allocation4], 0
    // Predicated region
    $region2: #{tpu_custom_call.1} parent=1 // pred_check
      _
    $region3: #{tpu_custom_call.1} parent=1 // pred_check_branch
      %16 = sbr.rel (0) target = $region5
    $region4: #{tpu_custom_call.1} parent=1 // pred_region
      %s18 = ssub.s32 4096, 4096
      %19 = vsyncadd [#allocation3], %s18
      %s20 = sshll.u32 [#allocation2], 4
      %s21 = int_to_ptr.vmem [resolvable:$true] %s20
      %26 = dma.hbm_to_vmem [thread:$0]  %s0, 4096, %s21, [#allocation3], 512, 512, 32
    $region5: #{tpu_custom_call.1} parent=1 // pred_fallthru
      _
    // Predicated region
    $region6: #{tpu_custom_call.1} parent=1 // pred_check
      _
    $region7: #{tpu_custom_call.1} parent=1 // pred_check_branch
      %28 = sbr.rel (0) target = $region9
    $region8: #{tpu_custom_call.1} parent=1 // pred_region
      %s30 = ssub.s32 4096, 4096
      %31 = vsyncadd [#allocation6], %s30
      %s32 = sshll.u32 [#allocation5], 4
      %s33 = int_to_ptr.vmem [resolvable:$true] %s32
      %38 = dma.hbm_to_vmem [thread:$0]  %s1, 4096, %s33, [#allocation6], 256, 256, 16
    $region9: #{tpu_custom_call.1} parent=1 // pred_fallthru
      _
    // Predicated region
    $region10: #{tpu_custom_call.1} parent=1 // pred_check
      _
    $region11: #{tpu_custom_call.1} parent=1 // pred_check_branch
      %40 = sbr.rel (0) target = $region13
    $region12: #{tpu_custom_call.1} parent=1 // pred_region
      %s42 = ssub.s32 1024, 1024
      %43 = vsyncadd [#allocation6], %s42
      %s44 = sshll.u32 [#allocation7], 4
      %s45 = int_to_ptr.vmem [resolvable:$true] %s44
      %50 = dma.hbm_to_vmem [thread:$0]  %s2, 1024, %s45, [#allocation6], 64, 64, 4
    $region13: #{tpu_custom_call.1} parent=1 // pred_fallthru
      _
    // Predicated region
    $region14: #{tpu_custom_call.1} parent=1 // pred_check
      _
    $region15: #{tpu_custom_call.1} parent=1 // pred_check_branch
      %52 = sbr.rel (0) target = $region17
    $region16: #{tpu_custom_call.1} parent=1 // pred_region
      _
    $region17: #{tpu_custom_call.1} parent=1 // pred_fallthru
      _
    // Predicated region
    $region18: #{tpu_custom_call.1} parent=1 // pred_check
      _
    $region19: #{tpu_custom_call.1} parent=1 // pred_check_branch
      %54 = sbr.rel (0) target = $region21
    $region20: #{tpu_custom_call.1} parent=1 // pred_region
      %s56 = ssub.s32 4096, 4096
      %57 = vsyncadd [#allocation9], %s56
      %s58 = sshll.u32 [#allocation8], 4
      %s59 = int_to_ptr.vmem [resolvable:$true] %s58
      %64 = dma.hbm_to_vmem [thread:$0]  %s4, 4096, %s59, [#allocation9], 256, 256, 16
    $region21: #{tpu_custom_call.1} parent=1 // pred_fallthru
      _
    // Predicated region
    $region22: #{tpu_custom_call.1} parent=1 // pred_check
      _
    $region23: #{tpu_custom_call.1} parent=1 // pred_check_branch
      %66 = sbr.rel (0) target = $region25
    $region24: #{tpu_custom_call.1} parent=1 // pred_region
      _
    $region25: #{tpu_custom_call.1} parent=1 // pred_fallthru
      _
    // Predicated region
    $region26: #{tpu_custom_call.1} parent=1 // pred_check
      _
    $region27: #{tpu_custom_call.1} parent=1 // pred_check_branch
      %68 = sbr.rel (0) target = $region29
    $region28: #{tpu_custom_call.1} parent=1 // pred_region
      %69 = dma.done [#allocation3], 4096
    $region29: #{tpu_custom_call.1} parent=1 // pred_fallthru
      _
    // Predicated region
    $region30: #{tpu_custom_call.1} parent=1 // pred_check
      _
    $region31: #{tpu_custom_call.1} parent=1 // pred_check_branch
      %71 = sbr.rel (0) target = $region33
    $region32: #{tpu_custom_call.1} parent=1 // pred_region
      %72 = dma.done [#allocation6], 4096
    $region33: #{tpu_custom_call.1} parent=1 // pred_fallthru
      _
    // Predicated region
    $region34: #{tpu_custom_call.1} parent=1 // pred_check
      _
    $region35: #{tpu_custom_call.1} parent=1 // pred_check_branch
      %74 = sbr.rel (0) target = $region37
    $region36: #{tpu_custom_call.1} parent=1 // pred_region
      %75 = dma.done [#allocation6], 1024
    $region37: #{tpu_custom_call.1} parent=1 // pred_fallthru
      _
    // Predicated region
    $region38: #{tpu_custom_call.1} parent=1 // pred_check
      _
    $region39: #{tpu_custom_call.1} parent=1 // pred_check_branch
      %77 = sbr.rel (0) target = $region41
    $region40: #{tpu_custom_call.1} parent=1 // pred_region
      %78 = dma.done [#allocation9], 4096
    $region41: #{tpu_custom_call.1} parent=1 // pred_fallthru
      _
    %v80 = vld [vmem:[#allocation2] sm:$0xff]
    %v81 = vld [vmem:[#allocation2 + $0x8] sm:$0xff]
    %v82 = vld [vmem:[#allocation2 + $0x10] sm:$0xff]
    %v83 = vld [vmem:[#allocation2 + $0x18] sm:$0xff]
    %v84 = vld [vmem:[#allocation5] sm:$0xff]
    %v85 = vld [vmem:[#allocation5 + $0x8] sm:$0xff]
    %v86 = vld [vmem:[#allocation5 + $0x10] sm:$0xff]
    %v87 = vld [vmem:[#allocation5 + $0x18] sm:$0xff]
    %v88 = vld [vmem:[#allocation5 + $0x20] sm:$0xff]
    %v89 = vld [vmem:[#allocation5 + $0x28] sm:$0xff]
    %v90 = vld [vmem:[#allocation5 + $0x30] sm:$0xff]
    %v91 = vld [vmem:[#allocation5 + $0x38] sm:$0xff]
    %v92 = vld [vmem:[#allocation5 + $0x40] sm:$0xff]
    %v93 = vld [vmem:[#allocation5 + $0x48] sm:$0xff]
    %v94 = vld [vmem:[#allocation5 + $0x50] sm:$0xff]
    %v95 = vld [vmem:[#allocation5 + $0x58] sm:$0xff]
    %v96 = vld [vmem:[#allocation5 + $0x60] sm:$0xff]
    %v97 = vld [vmem:[#allocation5 + $0x68] sm:$0xff]
    %v98 = vld [vmem:[#allocation5 + $0x70] sm:$0xff]
    %v99 = vld [vmem:[#allocation5 + $0x78] sm:$0xff]
    %v100 = vld [vmem:[#allocation5 + $0x80] sm:$0xff]
    %v101 = vld [vmem:[#allocation5 + $0x88] sm:$0xff]
    %v102 = vld [vmem:[#allocation5 + $0x90] sm:$0xff]
    %v103 = vld [vmem:[#allocation5 + $0x98] sm:$0xff]
    %v104 = vld [vmem:[#allocation5 + $0xa0] sm:$0xff]
    %v105 = vld [vmem:[#allocation5 + $0xa8] sm:$0xff]
    %v106 = vld [vmem:[#allocation5 + $0xb0] sm:$0xff]
    %v107 = vld [vmem:[#allocation5 + $0xb8] sm:$0xff]
    %v108 = vld [vmem:[#allocation5 + $0xc0] sm:$0xff]
    %v109 = vld [vmem:[#allocation5 + $0xc8] sm:$0xff]
    %v110 = vld [vmem:[#allocation5 + $0xd0] sm:$0xff]
    %v111 = vld [vmem:[#allocation5 + $0xd8] sm:$0xff]
    %v112 = vld [vmem:[#allocation5 + $0xe0] sm:$0xff]
    %v113 = vld [vmem:[#allocation5 + $0xe8] sm:$0xff]
    %v114 = vld [vmem:[#allocation5 + $0xf0] sm:$0xff]
    %v115 = vld [vmem:[#allocation5 + $0xf8] sm:$0xff]
    %v148 = vunpack.c.l.b16 %v84
    %v149 = vunpack.c.h.b16 %v84
    %v150 = vunpack.c.l.b16 %v85
    %v151 = vunpack.c.h.b16 %v85
    %v152 = vunpack.c.l.b16 %v86
    %v153 = vunpack.c.h.b16 %v86
    %v154 = vunpack.c.l.b16 %v87
    %v155 = vunpack.c.h.b16 %v87
    %v156 = vunpack.c.l.b16 %v88
    %v157 = vunpack.c.h.b16 %v88
    %v158 = vunpack.c.l.b16 %v89
    %v159 = vunpack.c.h.b16 %v89
    %v160 = vunpack.c.l.b16 %v90
    %v161 = vunpack.c.h.b16 %v90
    %v162 = vunpack.c.l.b16 %v91
    %v163 = vunpack.c.h.b16 %v91
    %v164 = vunpack.c.l.b16 %v92
    %v165 = vunpack.c.h.b16 %v92
    %v166 = vunpack.c.l.b16 %v93
    %v167 = vunpack.c.h.b16 %v93
    %v168 = vunpack.c.l.b16 %v94
    %v169 = vunpack.c.h.b16 %v94
    %v170 = vunpack.c.l.b16 %v95
    %v171 = vunpack.c.h.b16 %v95
    %v172 = vunpack.c.l.b16 %v96
    %v173 = vunpack.c.h.b16 %v96
    %v174 = vunpack.c.l.b16 %v97
    %v175 = vunpack.c.h.b16 %v97
    %v176 = vunpack.c.l.b16 %v98
    %v177 = vunpack.c.h.b16 %v98
    %v178 = vunpack.c.l.b16 %v99
    %v179 = vunpack.c.h.b16 %v99
    %v180 = vunpack.c.l.b16 %v100
    %v181 = vunpack.c.h.b16 %v100
    %v182 = vunpack.c.l.b16 %v101
    %v183 = vunpack.c.h.b16 %v101
    %v184 = vunpack.c.l.b16 %v102
    %v185 = vunpack.c.h.b16 %v102
    %v186 = vunpack.c.l.b16 %v103
    %v187 = vunpack.c.h.b16 %v103
    %v188 = vunpack.c.l.b16 %v104
    %v189 = vunpack.c.h.b16 %v104
    %v190 = vunpack.c.l.b16 %v105
    %v191 = vunpack.c.h.b16 %v105
    %v192 = vunpack.c.l.b16 %v106
    %v193 = vunpack.c.h.b16 %v106
    %v194 = vunpack.c.l.b16 %v107
    %v195 = vunpack.c.h.b16 %v107
    %v196 = vunpack.c.l.b16 %v108
    %v197 = vunpack.c.h.b16 %v108
    %v198 = vunpack.c.l.b16 %v109
    %v199 = vunpack.c.h.b16 %v109
    %v200 = vunpack.c.l.b16 %v110
    %v201 = vunpack.c.h.b16 %v110
    %v202 = vunpack.c.l.b16 %v111
    %v203 = vunpack.c.h.b16 %v111
    %v204 = vunpack.c.l.b16 %v112
    %v205 = vunpack.c.h.b16 %v112
    %v206 = vunpack.c.l.b16 %v113
    %v207 = vunpack.c.h.b16 %v113
    %v208 = vunpack.c.l.b16 %v114
    %v209 = vunpack.c.h.b16 %v114
    %v210 = vunpack.c.l.b16 %v115
    %v211 = vunpack.c.h.b16 %v115
    %v212 = vpack.c.b16 %v152, %v148
    %v213 = vpack.c.b16 %v153, %v149
    %v214 = vpack.c.b16 %v154, %v150
    %v215 = vpack.c.b16 %v155, %v151
    %v216 = vpack.c.b16 %v160, %v156
    %v217 = vpack.c.b16 %v161, %v157
    %v218 = vpack.c.b16 %v162, %v158
    %v219 = vpack.c.b16 %v163, %v159
    %v220 = vpack.c.b16 %v168, %v164
    %v221 = vpack.c.b16 %v169, %v165
    %v222 = vpack.c.b16 %v170, %v166
    %v223 = vpack.c.b16 %v171, %v167
    %v224 = vpack.c.b16 %v176, %v172
    %v225 = vpack.c.b16 %v177, %v173
    %v226 = vpack.c.b16 %v178, %v174
    %v227 = vpack.c.b16 %v179, %v175
    %v228 = vpack.c.b16 %v184, %v180
    %v229 = vpack.c.b16 %v185, %v181
    %v230 = vpack.c.b16 %v186, %v182
    %v231 = vpack.c.b16 %v187, %v183
    %v232 = vpack.c.b16 %v192, %v188
    %v233 = vpack.c.b16 %v193, %v189
    %v234 = vpack.c.b16 %v194, %v190
    %v235 = vpack.c.b16 %v195, %v191
    %v236 = vpack.c.b16 %v200, %v196
    %v237 = vpack.c.b16 %v201, %v197
    %v238 = vpack.c.b16 %v202, %v198
    %v239 = vpack.c.b16 %v203, %v199
    %v240 = vpack.c.b16 %v208, %v204
    %v241 = vpack.c.b16 %v209, %v205
    %v242 = vpack.c.b16 %v210, %v206
    %v243 = vpack.c.b16 %v211, %v207
    %276 = vmatprep.subr.bf16.mxu0 %v213
    %277 = vmatpush1.bf16.msra.mxu0 %v212
    %278 = vmatprep.subr.bf16.mxu0 %v217
    %279 = vmatpush1.bf16.msra.mxu0 %v216
    %280 = vmatprep.subr.bf16.mxu0 %v221
    %281 = vmatpush1.bf16.msra.mxu0 %v220
    %282 = vmatprep.subr.bf16.mxu0 %v225
    %283 = vmatpush1.bf16.msra.mxu0 %v224
    %284 = vmatprep.subr.bf16.mxu0 %v229
    %285 = vmatpush1.bf16.msra.mxu0 %v228
    %286 = vmatprep.subr.bf16.mxu0 %v233
    %287 = vmatpush1.bf16.msra.mxu0 %v232
    %288 = vmatprep.subr.bf16.mxu0 %v237
    %289 = vmatpush1.bf16.msra.mxu0 %v236
    %290 = vmatprep.subr.bf16.mxu0 %v241
    %291 = vmatpush1.bf16.msra.mxu0 %v240
    %292 = vmatprep.subr.bf16.mxu0 0
    %293 = vmatpush1.bf16.msra.mxu0 0
    %294 = vmatprep.subr.bf16.mxu0 0
    %295 = vmatpush1.bf16.msra.mxu0 0
    %296 = vmatprep.subr.bf16.mxu0 0
    %297 = vmatpush1.bf16.msra.mxu0 0
    %298 = vmatprep.subr.bf16.mxu0 0
    %299 = vmatpush1.bf16.msra.mxu0 0
    %300 = vmatprep.subr.bf16.mxu0 0
    %301 = vmatpush1.bf16.msra.mxu0 0
    %302 = vmatprep.subr.bf16.mxu0 0
    %303 = vmatpush1.bf16.msra.mxu0 0
    %304 = vmatprep.subr.bf16.mxu0 0
    %305 = vmatpush1.bf16.msra.mxu0 0
    %306 = vmatprep.subr.bf16.mxu0 0
    %307 = vmatpush1.bf16.msra.mxu0 0
    %308 = vmatprep.mubr.bf16.mxu0 0
    %309 = vmatmul.mubr.bf16.gmra.mrb[0].mxu0 0
    %v310 = vpop.f32.mrb[0].mxu0
    %v311 = vadd.f32 0.0, %v310
    %v312 = vpop.f32.mrb[0].mxu0
    %v313 = vadd.f32 0.0, %v312
    %v314 = vpop.f32.mrb[0].mxu0
    %v315 = vpop.f32.mrb[0].mxu0
    %316 = vdwg.mxu0
    %317 = vmatprep.subr.bf16.mxu0 %v215
    %318 = vmatpush1.bf16.msra.mxu0 %v214
    %319 = vmatprep.subr.bf16.mxu0 %v219
    %320 = vmatpush1.bf16.msra.mxu0 %v218
    %321 = vmatprep.subr.bf16.mxu0 %v223
    %322 = vmatpush1.bf16.msra.mxu0 %v222
    %323 = vmatprep.subr.bf16.mxu0 %v227
    %324 = vmatpush1.bf16.msra.mxu0 %v226
    %325 = vmatprep.subr.bf16.mxu0 %v231
    %326 = vmatpush1.bf16.msra.mxu0 %v230
    %327 = vmatprep.subr.bf16.mxu0 %v235
    %328 = vmatpush1.bf16.msra.mxu0 %v234
    %329 = vmatprep.subr.bf16.mxu0 %v239
    %330 = vmatpush1.bf16.msra.mxu0 %v238
    %331 = vmatprep.subr.bf16.mxu0 %v243
    %332 = vmatpush1.bf16.msra.mxu0 %v242
    %333 = vmatprep.subr.bf16.mxu0 0
    %334 = vmatpush1.bf16.msra.mxu0 0
    %335 = vmatprep.subr.bf16.mxu0 0
    %336 = vmatpush1.bf16.msra.mxu0 0
    %337 = vmatprep.subr.bf16.mxu0 0
    %338 = vmatpush1.bf16.msra.mxu0 0
    %339 = vmatprep.subr.bf16.mxu0 0
    %340 = vmatpush1.bf16.msra.mxu0 0
    %341 = vmatprep.subr.bf16.mxu0 0
    %342 = vmatpush1.bf16.msra.mxu0 0
    %343 = vmatprep.subr.bf16.mxu0 0
    %344 = vmatpush1.bf16.msra.mxu0 0
    %345 = vmatprep.subr.bf16.mxu0 0
    %346 = vmatpush1.bf16.msra.mxu0 0
    %347 = vmatprep.subr.bf16.mxu0 0
    %348 = vmatpush1.bf16.msra.mxu0 0
    %349 = vmatprep.mubr.bf16.mxu0 0
    %350 = vmatmul.mubr.bf16.gmra.mrb[0].mxu0 0
    %v351 = vpop.f32.mrb[0].mxu0
    %v352 = vadd.f32 0.0, %v351
    %v353 = vpop.f32.mrb[0].mxu0
    %v354 = vadd.f32 0.0, %v353
    %v355 = vpop.f32.mrb[0].mxu0
    %v356 = vpop.f32.mrb[0].mxu0
    %357 = vdwg.mxu0
    %v358 = vadd.f32 %v80, %v311
    %v359 = vadd.f32 %v81, %v313
    %v360 = vadd.f32 %v82, %v352
    %v361 = vadd.f32 %v83, %v354
    %v362 = vxor.u32 %v358, 2147483648
    %v363 = vmul.f32 %v362, 1.442695
    %v364 = vpow.pop %v363
    %v365 = vadd.f32 %v364, 1.0
    %v366 = vrcp.pop %v365
    %v367 = vmul.f32 1.0, %v366
    %v368 = vxor.u32 %v359, 2147483648
    %v369 = vmul.f32 %v368, 1.442695
    %v370 = vpow.pop %v369
    %v371 = vadd.f32 %v370, 1.0
    %v372 = vrcp.pop %v371
    %v373 = vmul.f32 1.0, %v372
    %v374 = vtanh.pop %v360
    %v375 = vxor.u32 %v361, 2147483648
    %v376 = vmul.f32 %v375, 1.442695
    %v377 = vpow.pop %v376
    %v378 = vadd.f32 %v377, 1.0
    %v379 = vrcp.pop %v378
    %v380 = vmul.f32 1.0, %v379
    %v381 = vmul.f32 %v373, 0.0
    %v382 = vmul.f32 %v367, %v374
    %v383 = vadd.f32 %v381, %v382
    %v384 = vtanh.pop %v383
    %v385 = vmul.f32 %v380, %v384
    %s386 = scalar_lea.vmem [#allocation2], 32
    %v387 = vld [vmem:[%s386] sm:$0xff]
    %v388 = vld [vmem:[%s386 + $0x8] sm:$0xff]
    %v389 = vld [vmem:[%s386 + $0x10] sm:$0xff]
    %v390 = vld [vmem:[%s386 + $0x18] sm:$0xff]
    %v391 = vpack.c.bf16 %v385, %v385
    %392 = vmatprep.subr.bf16.mxu0 %v213
    %393 = vmatpush1.bf16.msra.mxu0 %v212
    %394 = vmatprep.subr.bf16.mxu0 %v217
    %395 = vmatpush1.bf16.msra.mxu0 %v216
    %396 = vmatprep.subr.bf16.mxu0 %v221
    %397 = vmatpush1.bf16.msra.mxu0 %v220
    %398 = vmatprep.subr.bf16.mxu0 %v225
    %399 = vmatpush1.bf16.msra.mxu0 %v224
    %400 = vmatprep.subr.bf16.mxu0 %v229
    %401 = vmatpush1.bf16.msra.mxu0 %v228
    %402 = vmatprep.subr.bf16.mxu0 %v233
    %403 = vmatpush1.bf16.msra.mxu0 %v232
    %404 = vmatprep.subr.bf16.mxu0 %v237
    %405 = vmatpush1.bf16.msra.mxu0 %v236
    %406 = vmatprep.subr.bf16.mxu0 %v241
    %407 = vmatpush1.bf16.msra.mxu0 %v240
    %408 = vmatprep.subr.bf16.mxu0 0
    %409 = vmatpush1.bf16.msra.mxu0 0
    %410 = vmatprep.subr.bf16.mxu0 0
    %411 = vmatpush1.bf16.msra.mxu0 0
    %412 = vmatprep.subr.bf16.mxu0 0
    %413 = vmatpush1.bf16.msra.mxu0 0
    %414 = vmatprep.subr.bf16.mxu0 0
    %415 = vmatpush1.bf16.msra.mxu0 0
    %416 = vmatprep.subr.bf16.mxu0 0
    %417 = vmatpush1.bf16.msra.mxu0 0
    %418 = vmatprep.subr.bf16.mxu0 0
    %419 = vmatpush1.bf16.msra.mxu0 0
    %420 = vmatprep.subr.bf16.mxu0 0
    %421 = vmatpush1.bf16.msra.mxu0 0
    %422 = vmatprep.subr.bf16.mxu0 0
    %423 = vmatpush1.bf16.msra.mxu0 0
    %424 = vmatprep.mubr.bf16.mxu0 0
    %425 = vmatmul.mubr.bf16.gmra.mrb[0].mxu0 %v391
    %v426 = vpop.f32.mrb[0].mxu0
    %v427 = vadd.f32 0.0, %v426
    %v428 = vpop.f32.mrb[0].mxu0
    %v429 = vadd.f32 0.0, %v428
    %v430 = vpop.f32.mrb[0].mxu0
    %v431 = vpop.f32.mrb[0].mxu0
    %432 = vdwg.mxu0
    %433 = vmatprep.subr.bf16.mxu0 %v215
    %434 = vmatpush1.bf16.msra.mxu0 %v214
    %435 = vmatprep.subr.bf16.mxu0 %v219
    %436 = vmatpush1.bf16.msra.mxu0 %v218
    %437 = vmatprep.subr.bf16.mxu0 %v223
    %438 = vmatpush1.bf16.msra.mxu0 %v222
    %439 = vmatprep.subr.bf16.mxu0 %v227
    %440 = vmatpush1.bf16.msra.mxu0 %v226
    %441 = vmatprep.subr.bf16.mxu0 %v231
    %442 = vmatpush1.bf16.msra.mxu0 %v230
    %443 = vmatprep.subr.bf16.mxu0 %v235
    %444 = vmatpush1.bf16.msra.mxu0 %v234
    %445 = vmatprep.subr.bf16.mxu0 %v239
    %446 = vmatpush1.bf16.msra.mxu0 %v238
    %447 = vmatprep.subr.bf16.mxu0 %v243
    %448 = vmatpush1.bf16.msra.mxu0 %v242
    %449 = vmatprep.subr.bf16.mxu0 0
    %450 = vmatpush1.bf16.msra.mxu0 0
    %451 = vmatprep.subr.bf16.mxu0 0
    %452 = vmatpush1.bf16.msra.mxu0 0
    %453 = vmatprep.subr.bf16.mxu0 0
    %454 = vmatpush1.bf16.msra.mxu0 0
    %455 = vmatprep.subr.bf16.mxu0 0
    %456 = vmatpush1.bf16.msra.mxu0 0
    %457 = vmatprep.subr.bf16.mxu0 0
    %458 = vmatpush1.bf16.msra.mxu0 0
    %459 = vmatprep.subr.bf16.mxu0 0
    %460 = vmatpush1.bf16.msra.mxu0 0
    %461 = vmatprep.subr.bf16.mxu0 0
    %462 = vmatpush1.bf16.msra.mxu0 0
    %463 = vmatprep.subr.bf16.mxu0 0
    %464 = vmatpush1.bf16.msra.mxu0 0
    %465 = vmatprep.mubr.bf16.mxu0 0
    %466 = vmatmul.mubr.bf16.gmra.mrb[0].mxu0 %v391
    %v467 = vpop.f32.mrb[0].mxu0
    %v468 = vadd.f32 0.0, %v467
    %v469 = vpop.f32.mrb[0].mxu0
    %v470 = vadd.f32 0.0, %v469
    %v471 = vpop.f32.mrb[0].mxu0
    %v472 = vpop.f32.mrb[0].mxu0
    %473 = vdwg.mxu0
    %v474 = vadd.f32 %v387, %v427
    %v475 = vadd.f32 %v388, %v429
    %v476 = vadd.f32 %v389, %v468
    %v477 = vadd.f32 %v390, %v470
    %v478 = vxor.u32 %v474, 2147483648
    %v479 = vmul.f32 %v478, 1.442695
    %v480 = vpow.pop %v479
    %v481 = vadd.f32 %v480, 1.0
    %v482 = vrcp.pop %v481
    %v483 = vmul.f32 1.0, %v482
    %v484 = vxor.u32 %v475, 2147483648
    %v485 = vmul.f32 %v484, 1.442695
    %v486 = vpow.pop %v485
    %v487 = vadd.f32 %v486, 1.0
    %v488 = vrcp.pop %v487
    %v489 = vmul.f32 1.0, %v488
    %v490 = vtanh.pop %v476
    %v491 = vxor.u32 %v477, 2147483648
    %v492 = vmul.f32 %v491, 1.442695
    %v493 = vpow.pop %v492
    %v494 = vadd.f32 %v493, 1.0
    %v495 = vrcp.pop %v494
    %v496 = vmul.f32 1.0, %v495
    %v497 = vmul.f32 %v489, %v383
    %v498 = vmul.f32 %v483, %v490
    %v499 = vadd.f32 %v497, %v498
    %v500 = vtanh.pop %v499
    %v501 = vmul.f32 %v496, %v500
    %s502 = scalar_lea.vmem [#allocation2], 64
    %v503 = vld [vmem:[%s502] sm:$0xff]
    %v504 = vld [vmem:[%s502 + $0x8] sm:$0xff]
    %v505 = vld [vmem:[%s502 + $0x10] sm:$0xff]
    %v506 = vld [vmem:[%s502 + $0x18] sm:$0xff]
    %v507 = vpack.c.bf16 %v501, %v501
    %508 = vmatprep.subr.bf16.mxu0 %v213
    %509 = vmatpush1.bf16.msra.mxu0 %v212
    %510 = vmatprep.subr.bf16.mxu0 %v217
    %511 = vmatpush1.bf16.msra.mxu0 %v216
    %512 = vmatprep.subr.bf16.mxu0 %v221
    %513 = vmatpush1.bf16.msra.mxu0 %v220
    %514 = vmatprep.subr.bf16.mxu0 %v225
    %515 = vmatpush1.bf16.msra.mxu0 %v224
    %516 = vmatprep.subr.bf16.mxu0 %v229
    %517 = vmatpush1.bf16.msra.mxu0 %v228
    %518 = vmatprep.subr.bf16.mxu0 %v233
    %519 = vmatpush1.bf16.msra.mxu0 %v232
    %520 = vmatprep.subr.bf16.mxu0 %v237
    %521 = vmatpush1.bf16.msra.mxu0 %v236
    %522 = vmatprep.subr.bf16.mxu0 %v241
    %523 = vmatpush1.bf16.msra.mxu0 %v240
    %524 = vmatprep.subr.bf16.mxu0 0
    %525 = vmatpush1.bf16.msra.mxu0 0
    %526 = vmatprep.subr.bf16.mxu0 0
    %527 = vmatpush1.bf16.msra.mxu0 0
    %528 = vmatprep.subr.bf16.mxu0 0
    %529 = vmatpush1.bf16.msra.mxu0 0
    %530 = vmatprep.subr.bf16.mxu0 0
    %531 = vmatpush1.bf16.msra.mxu0 0
    %532 = vmatprep.subr.bf16.mxu0 0
    %533 = vmatpush1.bf16.msra.mxu0 0
    %534 = vmatprep.subr.bf16.mxu0 0
    %535 = vmatpush1.bf16.msra.mxu0 0
    %536 = vmatprep.subr.bf16.mxu0 0
    %537 = vmatpush1.bf16.msra.mxu0 0
    %538 = vmatprep.subr.bf16.mxu0 0
    %539 = vmatpush1.bf16.msra.mxu0 0
    %540 = vmatprep.mubr.bf16.mxu0 0
    %541 = vmatmul.mubr.bf16.gmra.mrb[0].mxu0 %v507
    %v542 = vpop.f32.mrb[0].mxu0
    %v543 = vadd.f32 0.0, %v542
    %v544 = vpop.f32.mrb[0].mxu0
    %v545 = vadd.f32 0.0, %v544
    %v546 = vpop.f32.mrb[0].mxu0
    %v547 = vpop.f32.mrb[0].mxu0
    %548 = vdwg.mxu0
    %549 = vmatprep.subr.bf16.mxu0 %v215
    %550 = vmatpush1.bf16.msra.mxu0 %v214
    %551 = vmatprep.subr.bf16.mxu0 %v219
    %552 = vmatpush1.bf16.msra.mxu0 %v218
    %553 = vmatprep.subr.bf16.mxu0 %v223
    %554 = vmatpush1.bf16.msra.mxu0 %v222
    %555 = vmatprep.subr.bf16.mxu0 %v227
    %556 = vmatpush1.bf16.msra.mxu0 %v226
    %557 = vmatprep.subr.bf16.mxu0 %v231
    %558 = vmatpush1.bf16.msra.mxu0 %v230
    %559 = vmatprep.subr.bf16.mxu0 %v235
    %560 = vmatpush1.bf16.msra.mxu0 %v234
    %561 = vmatprep.subr.bf16.mxu0 %v239
    %562 = vmatpush1.bf16.msra.mxu0 %v238
    %563 = vmatprep.subr.bf16.mxu0 %v243
    %564 = vmatpush1.bf16.msra.mxu0 %v242
    %565 = vmatprep.subr.bf16.mxu0 0
    %566 = vmatpush1.bf16.msra.mxu0 0
    %567 = vmatprep.subr.bf16.mxu0 0
    %568 = vmatpush1.bf16.msra.mxu0 0
    %569 = vmatprep.subr.bf16.mxu0 0
    %570 = vmatpush1.bf16.msra.mxu0 0
    %571 = vmatprep.subr.bf16.mxu0 0
    %572 = vmatpush1.bf16.msra.mxu0 0
    %573 = vmatprep.subr.bf16.mxu0 0
    %574 = vmatpush1.bf16.msra.mxu0 0
    %575 = vmatprep.subr.bf16.mxu0 0
    %576 = vmatpush1.bf16.msra.mxu0 0
    %577 = vmatprep.subr.bf16.mxu0 0
    %578 = vmatpush1.bf16.msra.mxu0 0
    %579 = vmatprep.subr.bf16.mxu0 0
    %580 = vmatpush1.bf16.msra.mxu0 0
    %581 = vmatprep.mubr.bf16.mxu0 0
    %582 = vmatmul.mubr.bf16.gmra.mrb[0].mxu0 %v507
    %v583 = vpop.f32.mrb[0].mxu0
    %v584 = vadd.f32 0.0, %v583
    %v585 = vpop.f32.mrb[0].mxu0
    %v586 = vadd.f32 0.0, %v585
    %v587 = vpop.f32.mrb[0].mxu0
    %v588 = vpop.f32.mrb[0].mxu0
    %589 = vdwg.mxu0
    %v590 = vadd.f32 %v503, %v543
    %v591 = vadd.f32 %v504, %v545
    %v592 = vadd.f32 %v505, %v584
    %v593 = vadd.f32 %v506, %v586
    %v594 = vxor.u32 %v590, 2147483648
    %v595 = vmul.f32 %v594, 1.442695
    %v596 = vpow.pop %v595
    %v597 = vadd.f32 %v596, 1.0
    %v598 = vrcp.pop %v597
    %v599 = vmul.f32 1.0, %v598
    %v600 = vxor.u32 %v591, 2147483648
    %v601 = vmul.f32 %v600, 1.442695
    %v602 = vpow.pop %v601
    %v603 = vadd.f32 %v602, 1.0
    %v604 = vrcp.pop %v603
    %v605 = vmul.f32 1.0, %v604
    %v606 = vtanh.pop %v592
    %v607 = vxor.u32 %v593, 2147483648
    %v608 = vmul.f32 %v607, 1.442695
    %v609 = vpow.pop %v608
    %v610 = vadd.f32 %v609, 1.0
    %v611 = vrcp.pop %v610
    %v612 = vmul.f32 1.0, %v611
    %v613 = vmul.f32 %v605, %v499
    %v614 = vmul.f32 %v599, %v606
    %v615 = vadd.f32 %v613, %v614
    %v616 = vtanh.pop %v615
    %v617 = vmul.f32 %v612, %v616
    %s618 = scalar_lea.vmem [#allocation2], 96
    %v619 = vld [vmem:[%s618] sm:$0xff]
    %v620 = vld [vmem:[%s618 + $0x8] sm:$0xff]
    %v621 = vld [vmem:[%s618 + $0x10] sm:$0xff]
    %v622 = vld [vmem:[%s618 + $0x18] sm:$0xff]
    %v623 = vpack.c.bf16 %v617, %v617
    %624 = vmatprep.subr.bf16.mxu0 %v213
    %625 = vmatpush1.bf16.msra.mxu0 %v212
    %626 = vmatprep.subr.bf16.mxu0 %v217
    %627 = vmatpush1.bf16.msra.mxu0 %v216
    %628 = vmatprep.subr.bf16.mxu0 %v221
    %629 = vmatpush1.bf16.msra.mxu0 %v220
    %630 = vmatprep.subr.bf16.mxu0 %v225
    %631 = vmatpush1.bf16.msra.mxu0 %v224
    %632 = vmatprep.subr.bf16.mxu0 %v229
    %633 = vmatpush1.bf16.msra.mxu0 %v228
    %634 = vmatprep.subr.bf16.mxu0 %v233
    %635 = vmatpush1.bf16.msra.mxu0 %v232
    %636 = vmatprep.subr.bf16.mxu0 %v237
    %637 = vmatpush1.bf16.msra.mxu0 %v236
    %638 = vmatprep.subr.bf16.mxu0 %v241
    %639 = vmatpush1.bf16.msra.mxu0 %v240
    %640 = vmatprep.subr.bf16.mxu0 0
    %641 = vmatpush1.bf16.msra.mxu0 0
    %642 = vmatprep.subr.bf16.mxu0 0
    %643 = vmatpush1.bf16.msra.mxu0 0
    %644 = vmatprep.subr.bf16.mxu0 0
    %645 = vmatpush1.bf16.msra.mxu0 0
    %646 = vmatprep.subr.bf16.mxu0 0
    %647 = vmatpush1.bf16.msra.mxu0 0
    %648 = vmatprep.subr.bf16.mxu0 0
    %649 = vmatpush1.bf16.msra.mxu0 0
    %650 = vmatprep.subr.bf16.mxu0 0
    %651 = vmatpush1.bf16.msra.mxu0 0
    %652 = vmatprep.subr.bf16.mxu0 0
    %653 = vmatpush1.bf16.msra.mxu0 0
    %654 = vmatprep.subr.bf16.mxu0 0
    %655 = vmatpush1.bf16.msra.mxu0 0
    %656 = vmatprep.mubr.bf16.mxu0 0
    %657 = vmatmul.mubr.bf16.gmra.mrb[0].mxu0 %v623
    %v658 = vpop.f32.mrb[0].mxu0
    %v659 = vadd.f32 0.0, %v658
    %v660 = vpop.f32.mrb[0].mxu0
    %v661 = vadd.f32 0.0, %v660
    %v662 = vpop.f32.mrb[0].mxu0
    %v663 = vpop.f32.mrb[0].mxu0
    %664 = vdwg.mxu0
    %665 = vmatprep.subr.bf16.mxu0 %v215
    %666 = vmatpush1.bf16.msra.mxu0 %v214
    %667 = vmatprep.subr.bf16.mxu0 %v219
    %668 = vmatpush1.bf16.msra.mxu0 %v218
    %669 = vmatprep.subr.bf16.mxu0 %v223
    %670 = vmatpush1.bf16.msra.mxu0 %v222
    %671 = vmatprep.subr.bf16.mxu0 %v227
    %672 = vmatpush1.bf16.msra.mxu0 %v226
    %673 = vmatprep.subr.bf16.mxu0 %v231
    %674 = vmatpush1.bf16.msra.mxu0 %v230
    %675 = vmatprep.subr.bf16.mxu0 %v235
    %676 = vmatpush1.bf16.msra.mxu0 %v234
    %677 = vmatprep.subr.bf16.mxu0 %v239
    %678 = vmatpush1.bf16.msra.mxu0 %v238
    %679 = vmatprep.subr.bf16.mxu0 %v243
    %680 = vmatpush1.bf16.msra.mxu0 %v242
    %681 = vmatprep.subr.bf16.mxu0 0
    %682 = vmatpush1.bf16.msra.mxu0 0
    %683 = vmatprep.subr.bf16.mxu0 0
    %684 = vmatpush1.bf16.msra.mxu0 0
    %685 = vmatprep.subr.bf16.mxu0 0
    %686 = vmatpush1.bf16.msra.mxu0 0
    %687 = vmatprep.subr.bf16.mxu0 0
    %688 = vmatpush1.bf16.msra.mxu0 0
    %689 = vmatprep.subr.bf16.mxu0 0
    %690 = vmatpush1.bf16.msra.mxu0 0
    %691 = vmatprep.subr.bf16.mxu0 0
    %692 = vmatpush1.bf16.msra.mxu0 0
    %693 = vmatprep.subr.bf16.mxu0 0
    %694 = vmatpush1.bf16.msra.mxu0 0
    %695 = vmatprep.subr.bf16.mxu0 0
    %696 = vmatpush1.bf16.msra.mxu0 0
    %697 = vmatprep.mubr.bf16.mxu0 0
    %698 = vmatmul.mubr.bf16.gmra.mrb[0].mxu0 %v623
    %v699 = vpop.f32.mrb[0].mxu0
    %v700 = vadd.f32 0.0, %v699
    %v701 = vpop.f32.mrb[0].mxu0
    %v702 = vadd.f32 0.0, %v701
    %v703 = vpop.f32.mrb[0].mxu0
    %v704 = vpop.f32.mrb[0].mxu0
    %705 = vdwg.mxu0
    %v706 = vadd.f32 %v619, %v659
    %v707 = vadd.f32 %v620, %v661
    %v708 = vadd.f32 %v621, %v700
    %v709 = vadd.f32 %v622, %v702
    %v710 = vxor.u32 %v706, 2147483648
    %v711 = vmul.f32 %v710, 1.442695
    %v712 = vpow.pop %v711
    %v713 = vadd.f32 %v712, 1.0
    %v714 = vrcp.pop %v713
    %v715 = vmul.f32 1.0, %v714
    %v716 = vxor.u32 %v707, 2147483648
    %v717 = vmul.f32 %v716, 1.442695
    %v718 = vpow.pop %v717
    %v719 = vadd.f32 %v718, 1.0
    %v720 = vrcp.pop %v719
    %v721 = vmul.f32 1.0, %v720
    %v722 = vtanh.pop %v708
    %v723 = vxor.u32 %v709, 2147483648
    %v724 = vmul.f32 %v723, 1.442695
    %v725 = vpow.pop %v724
    %v726 = vadd.f32 %v725, 1.0
    %v727 = vrcp.pop %v726
    %v728 = vmul.f32 1.0, %v727
    %v729 = vmul.f32 %v721, %v615
    %v730 = vmul.f32 %v715, %v722
    %v731 = vadd.f32 %v729, %v730
    %v732 = vtanh.pop %v731
    %v733 = vmul.f32 %v728, %v732
    %s734 = scalar_lea.vmem [#allocation2], 128
    %v735 = vld [vmem:[%s734] sm:$0xff]
    %v736 = vld [vmem:[%s734 + $0x8] sm:$0xff]
    %v737 = vld [vmem:[%s734 + $0x10] sm:$0xff]
    %v738 = vld [vmem:[%s734 + $0x18] sm:$0xff]
    %v739 = vpack.c.bf16 %v733, %v733
    %740 = vmatprep.subr.bf16.mxu0 %v213
    %741 = vmatpush1.bf16.msra.mxu0 %v212
    %742 = vmatprep.subr.bf16.mxu0 %v217
    %743 = vmatpush1.bf16.msra.mxu0 %v216
    %744 = vmatprep.subr.bf16.mxu0 %v221
    %745 = vmatpush1.bf16.msra.mxu0 %v220
    %746 = vmatprep.subr.bf16.mxu0 %v225
    %747 = vmatpush1.bf16.msra.mxu0 %v224
    %748 = vmatprep.subr.bf16.mxu0 %v229
    %749 = vmatpush1.bf16.msra.mxu0 %v228
    %750 = vmatprep.subr.bf16.mxu0 %v233
    %751 = vmatpush1.bf16.msra.mxu0 %v232
    %752 = vmatprep.subr.bf16.mxu0 %v237
    %753 = vmatpush1.bf16.msra.mxu0 %v236
    %754 = vmatprep.subr.bf16.mxu0 %v241
    %755 = vmatpush1.bf16.msra.mxu0 %v240
    %756 = vmatprep.subr.bf16.mxu0 0
    %757 = vmatpush1.bf16.msra.mxu0 0
    %758 = vmatprep.subr.bf16.mxu0 0
    %759 = vmatpush1.bf16.msra.mxu0 0
    %760 = vmatprep.subr.bf16.mxu0 0
    %761 = vmatpush1.bf16.msra.mxu0 0
    %762 = vmatprep.subr.bf16.mxu0 0
    %763 = vmatpush1.bf16.msra.mxu0 0
    %764 = vmatprep.subr.bf16.mxu0 0
    %765 = vmatpush1.bf16.msra.mxu0 0
    %766 = vmatprep.subr.bf16.mxu0 0
    %767 = vmatpush1.bf16.msra.mxu0 0
    %768 = vmatprep.subr.bf16.mxu0 0
    %769 = vmatpush1.bf16.msra.mxu0 0
    %770 = vmatprep.subr.bf16.mxu0 0
    %771 = vmatpush1.bf16.msra.mxu0 0
    %772 = vmatprep.mubr.bf16.mxu0 0
    %773 = vmatmul.mubr.bf16.gmra.mrb[0].mxu0 %v739
    %v774 = vpop.f32.mrb[0].mxu0
    %v775 = vadd.f32 0.0, %v774
    %v776 = vpop.f32.mrb[0].mxu0
    %v777 = vadd.f32 0.0, %v776
    %v778 = vpop.f32.mrb[0].mxu0
    %v779 = vpop.f32.mrb[0].mxu0
    %780 = vdwg.mxu0
    %781 = vmatprep.subr.bf16.mxu0 %v215
    %782 = vmatpush1.bf16.msra.mxu0 %v214
    %783 = vmatprep.subr.bf16.mxu0 %v219
    %784 = vmatpush1.bf16.msra.mxu0 %v218
    %785 = vmatprep.subr.bf16.mxu0 %v223
    %786 = vmatpush1.bf16.msra.mxu0 %v222
    %787 = vmatprep.subr.bf16.mxu0 %v227
    %788 = vmatpush1.bf16.msra.mxu0 %v226
    %789 = vmatprep.subr.bf16.mxu0 %v231
    %790 = vmatpush1.bf16.msra.mxu0 %v230
    %791 = vmatprep.subr.bf16.mxu0 %v235
    %792 = vmatpush1.bf16.msra.mxu0 %v234
    %793 = vmatprep.subr.bf16.mxu0 %v239
    %794 = vmatpush1.bf16.msra.mxu0 %v238
    %795 = vmatprep.subr.bf16.mxu0 %v243
    %796 = vmatpush1.bf16.msra.mxu0 %v242
    %797 = vmatprep.subr.bf16.mxu0 0
    %798 = vmatpush1.bf16.msra.mxu0 0
    %799 = vmatprep.subr.bf16.mxu0 0
    %800 = vmatpush1.bf16.msra.mxu0 0
    %801 = vmatprep.subr.bf16.mxu0 0
    %802 = vmatpush1.bf16.msra.mxu0 0
    %803 = vmatprep.subr.bf16.mxu0 0
    %804 = vmatpush1.bf16.msra.mxu0 0
    %805 = vmatprep.subr.bf16.mxu0 0
    %806 = vmatpush1.bf16.msra.mxu0 0
    %807 = vmatprep.subr.bf16.mxu0 0
    %808 = vmatpush1.bf16.msra.mxu0 0
    %809 = vmatprep.subr.bf16.mxu0 0
    %810 = vmatpush1.bf16.msra.mxu0 0
    %811 = vmatprep.subr.bf16.mxu0 0
    %812 = vmatpush1.bf16.msra.mxu0 0
    %813 = vmatprep.mubr.bf16.mxu0 0
    %814 = vmatmul.mubr.bf16.gmra.mrb[0].mxu0 %v739
    %v815 = vpop.f32.mrb[0].mxu0
    %v816 = vadd.f32 0.0, %v815
    %v817 = vpop.f32.mrb[0].mxu0
    %v818 = vadd.f32 0.0, %v817
    %v819 = vpop.f32.mrb[0].mxu0
    %v820 = vpop.f32.mrb[0].mxu0
    %821 = vdwg.mxu0
    %v822 = vadd.f32 %v735, %v775
    %v823 = vadd.f32 %v736, %v777
    %v824 = vadd.f32 %v737, %v816
    %v825 = vadd.f32 %v738, %v818
    %v826 = vxor.u32 %v822, 2147483648
    %v827 = vmul.f32 %v826, 1.442695
    %v828 = vpow.pop %v827
    %v829 = vadd.f32 %v828, 1.0
    %v830 = vrcp.pop %v829
    %v831 = vmul.f32 1.0, %v830
    %v832 = vxor.u32 %v823, 2147483648
    %v833 = vmul.f32 %v832, 1.442695
    %v834 = vpow.pop %v833
    %v835 = vadd.f32 %v834, 1.0
    %v836 = vrcp.pop %v835
    %v837 = vmul.f32 1.0, %v836
    %v838 = vtanh.pop %v824
    %v839 = vxor.u32 %v825, 2147483648
    %v840 = vmul.f32 %v839, 1.442695
    %v841 = vpow.pop %v840
    %v842 = vadd.f32 %v841, 1.0
    %v843 = vrcp.pop %v842
    %v844 = vmul.f32 1.0, %v843
    %v845 = vmul.f32 %v837, %v731
    %v846 = vmul.f32 %v831, %v838
    %v847 = vadd.f32 %v845, %v846
    %v848 = vtanh.pop %v847
    %v849 = vmul.f32 %v844, %v848
    %s850 = scalar_lea.vmem [#allocation2], 160
    %v851 = vld [vmem:[%s850] sm:$0xff]
    %v852 = vld [vmem:[%s850 + $0x8] sm:$0xff]
    %v853 = vld [vmem:[%s850 + $0x10] sm:$0xff]
    %v854 = vld [vmem:[%s850 + $0x18] sm:$0xff]
    %v855 = vpack.c.bf16 %v849, %v849
    %856 = vmatprep.subr.bf16.mxu0 %v213
    %857 = vmatpush1.bf16.msra.mxu0 %v212
    %858 = vmatprep.subr.bf16.mxu0 %v217
    %859 = vmatpush1.bf16.msra.mxu0 %v216
    %860 = vmatprep.subr.bf16.mxu0 %v221
    %861 = vmatpush1.bf16.msra.mxu0 %v220
    %862 = vmatprep.subr.bf16.mxu0 %v225
    %863 = vmatpush1.bf16.msra.mxu0 %v224
    %864 = vmatprep.subr.bf16.mxu0 %v229
    %865 = vmatpush1.bf16.msra.mxu0 %v228
    %866 = vmatprep.subr.bf16.mxu0 %v233
    %867 = vmatpush1.bf16.msra.mxu0 %v232
    %868 = vmatprep.subr.bf16.mxu0 %v237
    %869 = vmatpush1.bf16.msra.mxu0 %v236
    %870 = vmatprep.subr.bf16.mxu0 %v241
    %871 = vmatpush1.bf16.msra.mxu0 %v240
    %872 = vmatprep.subr.bf16.mxu0 0
    %873 = vmatpush1.bf16.msra.mxu0 0
    %874 = vmatprep.subr.bf16.mxu0 0
    %875 = vmatpush1.bf16.msra.mxu0 0
    %876 = vmatprep.subr.bf16.mxu0 0
    %877 = vmatpush1.bf16.msra.mxu0 0
    %878 = vmatprep.subr.bf16.mxu0 0
    %879 = vmatpush1.bf16.msra.mxu0 0
    %880 = vmatprep.subr.bf16.mxu0 0
    %881 = vmatpush1.bf16.msra.mxu0 0
    %882 = vmatprep.subr.bf16.mxu0 0
    %883 = vmatpush1.bf16.msra.mxu0 0
    %884 = vmatprep.subr.bf16.mxu0 0
    %885 = vmatpush1.bf16.msra.mxu0 0
    %886 = vmatprep.subr.bf16.mxu0 0
    %887 = vmatpush1.bf16.msra.mxu0 0
    %888 = vmatprep.mubr.bf16.mxu0 0
    %889 = vmatmul.mubr.bf16.gmra.mrb[0].mxu0 %v855
    %v890 = vpop.f32.mrb[0].mxu0
    %v891 = vadd.f32 0.0, %v890
    %v892 = vpop.f32.mrb[0].mxu0
    %v893 = vadd.f32 0.0, %v892
    %v894 = vpop.f32.mrb[0].mxu0
    %v895 = vpop.f32.mrb[0].mxu0
    %896 = vdwg.mxu0
    %897 = vmatprep.subr.bf16.mxu0 %v215
    %898 = vmatpush1.bf16.msra.mxu0 %v214
    %899 = vmatprep.subr.bf16.mxu0 %v219
    %900 = vmatpush1.bf16.msra.mxu0 %v218
    %901 = vmatprep.subr.bf16.mxu0 %v223
    %902 = vmatpush1.bf16.msra.mxu0 %v222
    %903 = vmatprep.subr.bf16.mxu0 %v227
    %904 = vmatpush1.bf16.msra.mxu0 %v226
    %905 = vmatprep.subr.bf16.mxu0 %v231
    %906 = vmatpush1.bf16.msra.mxu0 %v230
    %907 = vmatprep.subr.bf16.mxu0 %v235
    %908 = vmatpush1.bf16.msra.mxu0 %v234
    %909 = vmatprep.subr.bf16.mxu0 %v239
    %910 = vmatpush1.bf16.msra.mxu0 %v238
    %911 = vmatprep.subr.bf16.mxu0 %v243
    %912 = vmatpush1.bf16.msra.mxu0 %v242
    %913 = vmatprep.subr.bf16.mxu0 0
    %914 = vmatpush1.bf16.msra.mxu0 0
    %915 = vmatprep.subr.bf16.mxu0 0
    %916 = vmatpush1.bf16.msra.mxu0 0
    %917 = vmatprep.subr.bf16.mxu0 0
    %918 = vmatpush1.bf16.msra.mxu0 0
    %919 = vmatprep.subr.bf16.mxu0 0
    %920 = vmatpush1.bf16.msra.mxu0 0
    %921 = vmatprep.subr.bf16.mxu0 0
    %922 = vmatpush1.bf16.msra.mxu0 0
    %923 = vmatprep.subr.bf16.mxu0 0
    %924 = vmatpush1.bf16.msra.mxu0 0
    %925 = vmatprep.subr.bf16.mxu0 0
    %926 = vmatpush1.bf16.msra.mxu0 0
    %927 = vmatprep.subr.bf16.mxu0 0
    %928 = vmatpush1.bf16.msra.mxu0 0
    %929 = vmatprep.mubr.bf16.mxu0 0
    %930 = vmatmul.mubr.bf16.gmra.mrb[0].mxu0 %v855
    %v931 = vpop.f32.mrb[0].mxu0
    %v932 = vadd.f32 0.0, %v931
    %v933 = vpop.f32.mrb[0].mxu0
    %v934 = vadd.f32 0.0, %v933
    %v935 = vpop.f32.mrb[0].mxu0
    %v936 = vpop.f32.mrb[0].mxu0
    %937 = vdwg.mxu0
    %v938 = vadd.f32 %v851, %v891
    %v939 = vadd.f32 %v852, %v893
    %v940 = vadd.f32 %v853, %v932
    %v941 = vadd.f32 %v854, %v934
    %v942 = vxor.u32 %v938, 2147483648
    %v943 = vmul.f32 %v942, 1.442695
    %v944 = vpow.pop %v943
    %v945 = vadd.f32 %v944, 1.0
    %v946 = vrcp.pop %v945
    %v947 = vmul.f32 1.0, %v946
    %v948 = vxor.u32 %v939, 2147483648
    %v949 = vmul.f32 %v948, 1.442695
    %v950 = vpow.pop %v949
    %v951 = vadd.f32 %v950, 1.0
    %v952 = vrcp.pop %v951
    %v953 = vmul.f32 1.0, %v952
    %v954 = vtanh.pop %v940
    %v955 = vxor.u32 %v941, 2147483648
    %v956 = vmul.f32 %v955, 1.442695
    %v957 = vpow.pop %v956
    %v958 = vadd.f32 %v957, 1.0
    %v959 = vrcp.pop %v958
    %v960 = vmul.f32 1.0, %v959
    %v961 = vmul.f32 %v953, %v847
    %v962 = vmul.f32 %v947, %v954
    %v963 = vadd.f32 %v961, %v962
    %v964 = vtanh.pop %v963
    %v965 = vmul.f32 %v960, %v964
    %s966 = scalar_lea.vmem [#allocation2], 192
    %v967 = vld [vmem:[%s966] sm:$0xff]
    %v968 = vld [vmem:[%s966 + $0x8] sm:$0xff]
    %v969 = vld [vmem:[%s966 + $0x10] sm:$0xff]
    %v970 = vld [vmem:[%s966 + $0x18] sm:$0xff]
    %v971 = vpack.c.bf16 %v965, %v965
    %972 = vmatprep.subr.bf16.mxu0 %v213
    %973 = vmatpush1.bf16.msra.mxu0 %v212
    %974 = vmatprep.subr.bf16.mxu0 %v217
    %975 = vmatpush1.bf16.msra.mxu0 %v216
    %976 = vmatprep.subr.bf16.mxu0 %v221
    %977 = vmatpush1.bf16.msra.mxu0 %v220
    %978 = vmatprep.subr.bf16.mxu0 %v225
    %979 = vmatpush1.bf16.msra.mxu0 %v224
    %980 = vmatprep.subr.bf16.mxu0 %v229
    %981 = vmatpush1.bf16.msra.mxu0 %v228
    %982 = vmatprep.subr.bf16.mxu0 %v233
    %983 = vmatpush1.bf16.msra.mxu0 %v232
    %984 = vmatprep.subr.bf16.mxu0 %v237
    %985 = vmatpush1.bf16.msra.mxu0 %v236
    %986 = vmatprep.subr.bf16.mxu0 %v241
    %987 = vmatpush1.bf16.msra.mxu0 %v240
    %988 = vmatprep.subr.bf16.mxu0 0
    %989 = vmatpush1.bf16.msra.mxu0 0
    %990 = vmatprep.subr.bf16.mxu0 0
    %991 = vmatpush1.bf16.msra.mxu0 0
    %992 = vmatprep.subr.bf16.mxu0 0
    %993 = vmatpush1.bf16.msra.mxu0 0
    %994 = vmatprep.subr.bf16.mxu0 0
    %995 = vmatpush1.bf16.msra.mxu0 0
    %996 = vmatprep.subr.bf16.mxu0 0
    %997 = vmatpush1.bf16.msra.mxu0 0
    %998 = vmatprep.subr.bf16.mxu0 0
    %999 = vmatpush1.bf16.msra.mxu0 0
    %1000 = vmatprep.subr.bf16.mxu0 0
    %1001 = vmatpush1.bf16.msra.mxu0 0
    %1002 = vmatprep.subr.bf16.mxu0 0
    %1003 = vmatpush1.bf16.msra.mxu0 0
    %1004 = vmatprep.mubr.bf16.mxu0 0
    %1005 = vmatmul.mubr.bf16.gmra.mrb[0].mxu0 %v971
    %v1006 = vpop.f32.mrb[0].mxu0
    %v1007 = vadd.f32 0.0, %v1006
    %v1008 = vpop.f32.mrb[0].mxu0
    %v1009 = vadd.f32 0.0, %v1008
    %v1010 = vpop.f32.mrb[0].mxu0
    %v1011 = vpop.f32.mrb[0].mxu0
    %1012 = vdwg.mxu0
    %1013 = vmatprep.subr.bf16.mxu0 %v215
    %1014 = vmatpush1.bf16.msra.mxu0 %v214
    %1015 = vmatprep.subr.bf16.mxu0 %v219
    %1016 = vmatpush1.bf16.msra.mxu0 %v218
    %1017 = vmatprep.subr.bf16.mxu0 %v223
    %1018 = vmatpush1.bf16.msra.mxu0 %v222
    %1019 = vmatprep.subr.bf16.mxu0 %v227
    %1020 = vmatpush1.bf16.msra.mxu0 %v226
    %1021 = vmatprep.subr.bf16.mxu0 %v231
    %1022 = vmatpush1.bf16.msra.mxu0 %v230
    %1023 = vmatprep.subr.bf16.mxu0 %v235
    %1024 = vmatpush1.bf16.msra.mxu0 %v234
    %1025 = vmatprep.subr.bf16.mxu0 %v239
    %1026 = vmatpush1.bf16.msra.mxu0 %v238
    %1027 = vmatprep.subr.bf16.mxu0 %v243
    %1028 = vmatpush1.bf16.msra.mxu0 %v242
    %1029 = vmatprep.subr.bf16.mxu0 0
    %1030 = vmatpush1.bf16.msra.mxu0 0
    %1031 = vmatprep.subr.bf16.mxu0 0
    %1032 = vmatpush1.bf16.msra.mxu0 0
    %1033 = vmatprep.subr.bf16.mxu0 0
    %1034 = vmatpush1.bf16.msra.mxu0 0
    %1035 = vmatprep.subr.bf16.mxu0 0
    %1036 = vmatpush1.bf16.msra.mxu0 0
    %1037 = vmatprep.subr.bf16.mxu0 0
    %1038 = vmatpush1.bf16.msra.mxu0 0
    %1039 = vmatprep.subr.bf16.mxu0 0
    %1040 = vmatpush1.bf16.msra.mxu0 0
    %1041 = vmatprep.subr.bf16.mxu0 0
    %1042 = vmatpush1.bf16.msra.mxu0 0
    %1043 = vmatprep.subr.bf16.mxu0 0
    %1044 = vmatpush1.bf16.msra.mxu0 0
    %1045 = vmatprep.mubr.bf16.mxu0 0
    %1046 = vmatmul.mubr.bf16.gmra.mrb[0].mxu0 %v971
    %v1047 = vpop.f32.mrb[0].mxu0
    %v1048 = vadd.f32 0.0, %v1047
    %v1049 = vpop.f32.mrb[0].mxu0
    %v1050 = vadd.f32 0.0, %v1049
    %v1051 = vpop.f32.mrb[0].mxu0
    %v1052 = vpop.f32.mrb[0].mxu0
    %1053 = vdwg.mxu0
    %v1054 = vadd.f32 %v967, %v1007
    %v1055 = vadd.f32 %v968, %v1009
    %v1056 = vadd.f32 %v969, %v1048
    %v1057 = vadd.f32 %v970, %v1050
    %v1058 = vxor.u32 %v1054, 2147483648
    %v1059 = vmul.f32 %v1058, 1.442695
    %v1060 = vpow.pop %v1059
    %v1061 = vadd.f32 %v1060, 1.0
    %v1062 = vrcp.pop %v1061
    %v1063 = vmul.f32 1.0, %v1062
    %v1064 = vxor.u32 %v1055, 2147483648
    %v1065 = vmul.f32 %v1064, 1.442695
    %v1066 = vpow.pop %v1065
    %v1067 = vadd.f32 %v1066, 1.0
    %v1068 = vrcp.pop %v1067
    %v1069 = vmul.f32 1.0, %v1068
    %v1070 = vtanh.pop %v1056
    %v1071 = vxor.u32 %v1057, 2147483648
    %v1072 = vmul.f32 %v1071, 1.442695
    %v1073 = vpow.pop %v1072
    %v1074 = vadd.f32 %v1073, 1.0
    %v1075 = vrcp.pop %v1074
    %v1076 = vmul.f32 1.0, %v1075
    %v1077 = vmul.f32 %v1069, %v963
    %v1078 = vmul.f32 %v1063, %v1070
    %v1079 = vadd.f32 %v1077, %v1078
    %v1080 = vtanh.pop %v1079
    %v1081 = vmul.f32 %v1076, %v1080
    %s1082 = scalar_lea.vmem [#allocation2], 224
    %v1083 = vld [vmem:[%s1082] sm:$0xff]
    %v1084 = vld [vmem:[%s1082 + $0x8] sm:$0xff]
    %v1085 = vld [vmem:[%s1082 + $0x10] sm:$0xff]
    %v1086 = vld [vmem:[%s1082 + $0x18] sm:$0xff]
    %v1087 = vpack.c.bf16 %v1081, %v1081
    %1088 = vmatprep.subr.bf16.mxu0 %v213
    %1089 = vmatpush1.bf16.msra.mxu0 %v212
    %1090 = vmatprep.subr.bf16.mxu0 %v217
    %1091 = vmatpush1.bf16.msra.mxu0 %v216
    %1092 = vmatprep.subr.bf16.mxu0 %v221
    %1093 = vmatpush1.bf16.msra.mxu0 %v220
    %1094 = vmatprep.subr.bf16.mxu0 %v225
    %1095 = vmatpush1.bf16.msra.mxu0 %v224
    %1096 = vmatprep.subr.bf16.mxu0 %v229
    %1097 = vmatpush1.bf16.msra.mxu0 %v228
    %1098 = vmatprep.subr.bf16.mxu0 %v233
    %1099 = vmatpush1.bf16.msra.mxu0 %v232
    %1100 = vmatprep.subr.bf16.mxu0 %v237
    %1101 = vmatpush1.bf16.msra.mxu0 %v236
    %1102 = vmatprep.subr.bf16.mxu0 %v241
    %1103 = vmatpush1.bf16.msra.mxu0 %v240
    %1104 = vmatprep.subr.bf16.mxu0 0
    %1105 = vmatpush1.bf16.msra.mxu0 0
    %1106 = vmatprep.subr.bf16.mxu0 0
    %1107 = vmatpush1.bf16.msra.mxu0 0
    %1108 = vmatprep.subr.bf16.mxu0 0
    %1109 = vmatpush1.bf16.msra.mxu0 0
    %1110 = vmatprep.subr.bf16.mxu0 0
    %1111 = vmatpush1.bf16.msra.mxu0 0
    %1112 = vmatprep.subr.bf16.mxu0 0
    %1113 = vmatpush1.bf16.msra.mxu0 0
    %1114 = vmatprep.subr.bf16.mxu0 0
    %1115 = vmatpush1.bf16.msra.mxu0 0
    %1116 = vmatprep.subr.bf16.mxu0 0
    %1117 = vmatpush1.bf16.msra.mxu0 0
    %1118 = vmatprep.subr.bf16.mxu0 0
    %1119 = vmatpush1.bf16.msra.mxu0 0
    %1120 = vmatprep.mubr.bf16.mxu0 0
    %1121 = vmatmul.mubr.bf16.gmra.mrb[0].mxu0 %v1087
    %v1122 = vpop.f32.mrb[0].mxu0
    %v1123 = vadd.f32 0.0, %v1122
    %v1124 = vpop.f32.mrb[0].mxu0
    %v1125 = vadd.f32 0.0, %v1124
    %v1126 = vpop.f32.mrb[0].mxu0
    %v1127 = vpop.f32.mrb[0].mxu0
    %1128 = vdwg.mxu0
    %1129 = vmatprep.subr.bf16.mxu0 %v215
    %1130 = vmatpush1.bf16.msra.mxu0 %v214
    %1131 = vmatprep.subr.bf16.mxu0 %v219
    %1132 = vmatpush1.bf16.msra.mxu0 %v218
    %1133 = vmatprep.subr.bf16.mxu0 %v223
    %1134 = vmatpush1.bf16.msra.mxu0 %v222
    %1135 = vmatprep.subr.bf16.mxu0 %v227
    %1136 = vmatpush1.bf16.msra.mxu0 %v226
    %1137 = vmatprep.subr.bf16.mxu0 %v231
    %1138 = vmatpush1.bf16.msra.mxu0 %v230
    %1139 = vmatprep.subr.bf16.mxu0 %v235
    %1140 = vmatpush1.bf16.msra.mxu0 %v234
    %1141 = vmatprep.subr.bf16.mxu0 %v239
    %1142 = vmatpush1.bf16.msra.mxu0 %v238
    %1143 = vmatprep.subr.bf16.mxu0 %v243
    %1144 = vmatpush1.bf16.msra.mxu0 %v242
    %1145 = vmatprep.subr.bf16.mxu0 0
    %1146 = vmatpush1.bf16.msra.mxu0 0
    %1147 = vmatprep.subr.bf16.mxu0 0
    %1148 = vmatpush1.bf16.msra.mxu0 0
    %1149 = vmatprep.subr.bf16.mxu0 0
    %1150 = vmatpush1.bf16.msra.mxu0 0
    %1151 = vmatprep.subr.bf16.mxu0 0
    %1152 = vmatpush1.bf16.msra.mxu0 0
    %1153 = vmatprep.subr.bf16.mxu0 0
    %1154 = vmatpush1.bf16.msra.mxu0 0
    %1155 = vmatprep.subr.bf16.mxu0 0
    %1156 = vmatpush1.bf16.msra.mxu0 0
    %1157 = vmatprep.subr.bf16.mxu0 0
    %1158 = vmatpush1.bf16.msra.mxu0 0
    %1159 = vmatprep.subr.bf16.mxu0 0
    %1160 = vmatpush1.bf16.msra.mxu0 0
    %1161 = vmatprep.mubr.bf16.mxu0 0
    %1162 = vmatmul.mubr.bf16.gmra.mrb[0].mxu0 %v1087
    %v1163 = vpop.f32.mrb[0].mxu0
    %v1164 = vadd.f32 0.0, %v1163
    %v1165 = vpop.f32.mrb[0].mxu0
    %v1166 = vadd.f32 0.0, %v1165
    %v1167 = vpop.f32.mrb[0].mxu0
    %v1168 = vpop.f32.mrb[0].mxu0
    %1169 = vdwg.mxu0
    %v1170 = vadd.f32 %v1083, %v1123
    %v1171 = vadd.f32 %v1084, %v1125
    %v1172 = vadd.f32 %v1085, %v1164
    %v1173 = vadd.f32 %v1086, %v1166
    %v1174 = vxor.u32 %v1170, 2147483648
    %v1175 = vmul.f32 %v1174, 1.442695
    %v1176 = vpow.pop %v1175
    %v1177 = vadd.f32 %v1176, 1.0
    %v1178 = vrcp.pop %v1177
    %v1179 = vmul.f32 1.0, %v1178
    %v1180 = vxor.u32 %v1171, 2147483648
    %v1181 = vmul.f32 %v1180, 1.442695
    %v1182 = vpow.pop %v1181
    %v1183 = vadd.f32 %v1182, 1.0
    %v1184 = vrcp.pop %v1183
    %v1185 = vmul.f32 1.0, %v1184
    %v1186 = vtanh.pop %v1172
    %v1187 = vxor.u32 %v1173, 2147483648
    %v1188 = vmul.f32 %v1187, 1.442695
    %v1189 = vpow.pop %v1188
    %v1190 = vadd.f32 %v1189, 1.0
    %v1191 = vrcp.pop %v1190
    %v1192 = vmul.f32 1.0, %v1191
    %v1193 = vmul.f32 %v1185, %v1079
    %v1194 = vmul.f32 %v1179, %v1186
    %v1195 = vadd.f32 %v1193, %v1194
    %v1196 = vtanh.pop %v1195
    %v1197 = vmul.f32 %v1192, %v1196
    %v1198 = vpack.c.bf16 %v1197, %v1197
    %v1199 = vld [vmem:[#allocation7] sm:$0xf]
    %v1200 = vld [vmem:[#allocation7 + $0x4] sm:$0xf]
    %v1201 = vld [vmem:[#allocation7 + $0x8] sm:$0xf]
    %v1202 = vld [vmem:[#allocation7 + $0xc] sm:$0xf]
    %v1203 = vld [vmem:[#allocation7 + $0x10] sm:$0xf]
    %v1204 = vld [vmem:[#allocation7 + $0x14] sm:$0xf]
    %v1205 = vld [vmem:[#allocation7 + $0x18] sm:$0xf]
    %v1206 = vld [vmem:[#allocation7 + $0x1c] sm:$0xf]
    %v1207 = vld [vmem:[#allocation7 + $0x20] sm:$0xf]
    %v1208 = vld [vmem:[#allocation7 + $0x24] sm:$0xf]
    %v1209 = vld [vmem:[#allocation7 + $0x28] sm:$0xf]
    %v1210 = vld [vmem:[#allocation7 + $0x2c] sm:$0xf]
    %v1211 = vld [vmem:[#allocation7 + $0x30] sm:$0xf]
    %v1212 = vld [vmem:[#allocation7 + $0x34] sm:$0xf]
    %v1213 = vld [vmem:[#allocation7 + $0x38] sm:$0xf]
    %v1214 = vld [vmem:[#allocation7 + $0x3c] sm:$0xf]
    %v1215 = vld [vmem:[%s3] sm:$0x1]
    %v1217 = vlaneseq
    %v1218 = vshrl.u32 %v1217, 7
    %v1219 = vsub.s32 0, %v1218
    %v1220 = vrot.slane %v1215, %v1219
    %v1238 = vunpack.c.l.b16 %v1199
    %v1239 = vunpack.c.l.b16 %v1200
    %v1240 = vunpack.c.l.b16 %v1201
    %v1241 = vunpack.c.l.b16 %v1202
    %v1242 = vunpack.c.l.b16 %v1203
    %v1243 = vunpack.c.l.b16 %v1204
    %v1244 = vunpack.c.l.b16 %v1205
    %v1245 = vunpack.c.l.b16 %v1206
    %v1246 = vunpack.c.l.b16 %v1207
    %v1247 = vunpack.c.l.b16 %v1208
    %v1248 = vunpack.c.l.b16 %v1209
    %v1249 = vunpack.c.l.b16 %v1210
    %v1250 = vunpack.c.l.b16 %v1211
    %v1251 = vunpack.c.l.b16 %v1212
    %v1252 = vunpack.c.l.b16 %v1213
    %v1253 = vunpack.c.l.b16 %v1214
    %v1254 = vpack.c.b16 %v1239, %v1238
    %v1255 = vpack.c.b16 %v1241, %v1240
    %v1256 = vpack.c.b16 %v1243, %v1242
    %v1257 = vpack.c.b16 %v1245, %v1244
    %v1258 = vpack.c.b16 %v1247, %v1246
    %v1259 = vpack.c.b16 %v1249, %v1248
    %v1260 = vpack.c.b16 %v1251, %v1250
    %v1261 = vpack.c.b16 %v1253, %v1252
    %1270 = vmatprep.subr.bf16.mxu0 0
    %1271 = vmatpush1.bf16.msra.mxu0 %v1254
    %1272 = vmatprep.subr.bf16.mxu0 0
    %1273 = vmatpush1.bf16.msra.mxu0 %v1255
    %1274 = vmatprep.subr.bf16.mxu0 0
    %1275 = vmatpush1.bf16.msra.mxu0 %v1256
    %1276 = vmatprep.subr.bf16.mxu0 0
    %1277 = vmatpush1.bf16.msra.mxu0 %v1257
    %1278 = vmatprep.subr.bf16.mxu0 0
    %1279 = vmatpush1.bf16.msra.mxu0 %v1258
    %1280 = vmatprep.subr.bf16.mxu0 0
    %1281 = vmatpush1.bf16.msra.mxu0 %v1259
    %1282 = vmatprep.subr.bf16.mxu0 0
    %1283 = vmatpush1.bf16.msra.mxu0 %v1260
    %1284 = vmatprep.subr.bf16.mxu0 0
    %1285 = vmatpush1.bf16.msra.mxu0 %v1261
    %1286 = vmatprep.subr.bf16.mxu0 0
    %1287 = vmatpush1.bf16.msra.mxu0 0
    %1288 = vmatprep.subr.bf16.mxu0 0
    %1289 = vmatpush1.bf16.msra.mxu0 0
    %1290 = vmatprep.subr.bf16.mxu0 0
    %1291 = vmatpush1.bf16.msra.mxu0 0
    %1292 = vmatprep.subr.bf16.mxu0 0
    %1293 = vmatpush1.bf16.msra.mxu0 0
    %1294 = vmatprep.subr.bf16.mxu0 0
    %1295 = vmatpush1.bf16.msra.mxu0 0
    %1296 = vmatprep.subr.bf16.mxu0 0
    %1297 = vmatpush1.bf16.msra.mxu0 0
    %1298 = vmatprep.subr.bf16.mxu0 0
    %1299 = vmatpush1.bf16.msra.mxu0 0
    %1300 = vmatprep.subr.bf16.mxu0 0
    %1301 = vmatpush1.bf16.msra.mxu0 0
    %1302 = vmatprep.mubr.bf16.mxu0 0
    %1303 = vmatmul.mubr.bf16.gmra.mrb[0].mxu0 %v1198
    %v1304 = vpop.f32.mrb[0].mxu0
    %v1305 = vadd.f32 %v1220, %v1304
    %v1306 = vpop.f32.mrb[0].mxu0
    %v1307 = vpop.f32.mrb[0].mxu0
    %v1308 = vpop.f32.mrb[0].mxu0
    %1309 = vdwg.mxu0
    %v1310 = vmax.f32 %v1305, 0.0
    %v1311 = vpack.c.bf16 %v1310, %v1310
    %v1312 = vld [vmem:[#allocation8] sm:$0xff]
    %v1313 = vld [vmem:[#allocation8 + $0x8] sm:$0xff]
    %v1314 = vld [vmem:[#allocation8 + $0x10] sm:$0xff]
    %v1315 = vld [vmem:[#allocation8 + $0x18] sm:$0xff]
    %v1316 = vld [vmem:[#allocation8 + $0x20] sm:$0xff]
    %v1317 = vld [vmem:[#allocation8 + $0x28] sm:$0xff]
    %v1318 = vld [vmem:[#allocation8 + $0x30] sm:$0xff]
    %v1319 = vld [vmem:[#allocation8 + $0x38] sm:$0xff]
    %v1320 = vld [vmem:[#allocation8 + $0x40] sm:$0xff]
    %v1321 = vld [vmem:[#allocation8 + $0x48] sm:$0xff]
    %v1322 = vld [vmem:[#allocation8 + $0x50] sm:$0xff]
    %v1323 = vld [vmem:[#allocation8 + $0x58] sm:$0xff]
    %v1324 = vld [vmem:[#allocation8 + $0x60] sm:$0xff]
    %v1325 = vld [vmem:[#allocation8 + $0x68] sm:$0xff]
    %v1326 = vld [vmem:[#allocation8 + $0x70] sm:$0xff]
    %v1327 = vld [vmem:[#allocation8 + $0x78] sm:$0xff]
    %v1328 = vld [vmem:[#allocation8 + $0x80] sm:$0xff]
    %v1329 = vld [vmem:[#allocation8 + $0x88] sm:$0xff]
    %v1330 = vld [vmem:[#allocation8 + $0x90] sm:$0xff]
    %v1331 = vld [vmem:[#allocation8 + $0x98] sm:$0xff]
    %v1332 = vld [vmem:[#allocation8 + $0xa0] sm:$0xff]
    %v1333 = vld [vmem:[#allocation8 + $0xa8] sm:$0xff]
    %v1334 = vld [vmem:[#allocation8 + $0xb0] sm:$0xff]
    %v1335 = vld [vmem:[#allocation8 + $0xb8] sm:$0xff]
    %v1336 = vld [vmem:[#allocation8 + $0xc0] sm:$0xff]
    %v1337 = vld [vmem:[#allocation8 + $0xc8] sm:$0xff]
    %v1338 = vld [vmem:[#allocation8 + $0xd0] sm:$0xff]
    %v1339 = vld [vmem:[#allocation8 + $0xd8] sm:$0xff]
    %v1340 = vld [vmem:[#allocation8 + $0xe0] sm:$0xff]
    %v1341 = vld [vmem:[#allocation8 + $0xe8] sm:$0xff]
    %v1342 = vld [vmem:[#allocation8 + $0xf0] sm:$0xff]
    %v1343 = vld [vmem:[#allocation8 + $0xf8] sm:$0xff]
    %v1344 = vld [vmem:[%s5] sm:$0xf]
    %v1346 = vlaneseq
    %v1347 = vshrl.u32 %v1346, 7
    %v1348 = vsub.s32 0, %v1347
    %v1349 = vrot.slane %v1344, %v1348
    %v1350 = vlaneseq
    %v1351 = vshrl.u32 %v1350, 7
    %v1352 = vsub.s32 1, %v1351
    %v1353 = vrot.slane %v1344, %v1352
    %v1354 = vlaneseq
    %v1355 = vshrl.u32 %v1354, 7
    %v1356 = vsub.s32 2, %v1355
    %v1357 = vrot.slane %v1344, %v1356
    %v1358 = vlaneseq
    %v1359 = vshrl.u32 %v1358, 7
    %v1360 = vsub.s32 3, %v1359
    %v1361 = vrot.slane %v1344, %v1360
    %v1398 = vunpack.c.l.b16 %v1312
    %v1399 = vunpack.c.h.b16 %v1312
    %v1400 = vunpack.c.l.b16 %v1313
    %v1401 = vunpack.c.h.b16 %v1313
    %v1402 = vunpack.c.l.b16 %v1314
    %v1403 = vunpack.c.h.b16 %v1314
    %v1404 = vunpack.c.l.b16 %v1315
    %v1405 = vunpack.c.h.b16 %v1315
    %v1406 = vunpack.c.l.b16 %v1316
    %v1407 = vunpack.c.h.b16 %v1316
    %v1408 = vunpack.c.l.b16 %v1317
    %v1409 = vunpack.c.h.b16 %v1317
    %v1410 = vunpack.c.l.b16 %v1318
    %v1411 = vunpack.c.h.b16 %v1318
    %v1412 = vunpack.c.l.b16 %v1319
    %v1413 = vunpack.c.h.b16 %v1319
    %v1414 = vunpack.c.l.b16 %v1320
    %v1415 = vunpack.c.h.b16 %v1320
    %v1416 = vunpack.c.l.b16 %v1321
    %v1417 = vunpack.c.h.b16 %v1321
    %v1418 = vunpack.c.l.b16 %v1322
    %v1419 = vunpack.c.h.b16 %v1322
    %v1420 = vunpack.c.l.b16 %v1323
    %v1421 = vunpack.c.h.b16 %v1323
    %v1422 = vunpack.c.l.b16 %v1324
    %v1423 = vunpack.c.h.b16 %v1324
    %v1424 = vunpack.c.l.b16 %v1325
    %v1425 = vunpack.c.h.b16 %v1325
    %v1426 = vunpack.c.l.b16 %v1326
    %v1427 = vunpack.c.h.b16 %v1326
    %v1428 = vunpack.c.l.b16 %v1327
    %v1429 = vunpack.c.h.b16 %v1327
    %v1430 = vunpack.c.l.b16 %v1328
    %v1431 = vunpack.c.h.b16 %v1328
    %v1432 = vunpack.c.l.b16 %v1329
    %v1433 = vunpack.c.h.b16 %v1329
    %v1434 = vunpack.c.l.b16 %v1330
    %v1435 = vunpack.c.h.b16 %v1330
    %v1436 = vunpack.c.l.b16 %v1331
    %v1437 = vunpack.c.h.b16 %v1331
    %v1438 = vunpack.c.l.b16 %v1332
    %v1439 = vunpack.c.h.b16 %v1332
    %v1440 = vunpack.c.l.b16 %v1333
    %v1441 = vunpack.c.h.b16 %v1333
    %v1442 = vunpack.c.l.b16 %v1334
    %v1443 = vunpack.c.h.b16 %v1334
    %v1444 = vunpack.c.l.b16 %v1335
    %v1445 = vunpack.c.h.b16 %v1335
    %v1446 = vunpack.c.l.b16 %v1336
    %v1447 = vunpack.c.h.b16 %v1336
    %v1448 = vunpack.c.l.b16 %v1337
    %v1449 = vunpack.c.h.b16 %v1337
    %v1450 = vunpack.c.l.b16 %v1338
    %v1451 = vunpack.c.h.b16 %v1338
    %v1452 = vunpack.c.l.b16 %v1339
    %v1453 = vunpack.c.h.b16 %v1339
    %v1454 = vunpack.c.l.b16 %v1340
    %v1455 = vunpack.c.h.b16 %v1340
    %v1456 = vunpack.c.l.b16 %v1341
    %v1457 = vunpack.c.h.b16 %v1341
    %v1458 = vunpack.c.l.b16 %v1342
    %v1459 = vunpack.c.h.b16 %v1342
    %v1460 = vunpack.c.l.b16 %v1343
    %v1461 = vunpack.c.h.b16 %v1343
    %v1462 = vpack.c.b16 %v1402, %v1398
    %v1463 = vpack.c.b16 %v1403, %v1399
    %v1464 = vpack.c.b16 %v1404, %v1400
    %v1465 = vpack.c.b16 %v1405, %v1401
    %v1466 = vpack.c.b16 %v1410, %v1406
    %v1467 = vpack.c.b16 %v1411, %v1407
    %v1468 = vpack.c.b16 %v1412, %v1408
    %v1469 = vpack.c.b16 %v1413, %v1409
    %v1470 = vpack.c.b16 %v1418, %v1414
    %v1471 = vpack.c.b16 %v1419, %v1415
    %v1472 = vpack.c.b16 %v1420, %v1416
    %v1473 = vpack.c.b16 %v1421, %v1417
    %v1474 = vpack.c.b16 %v1426, %v1422
    %v1475 = vpack.c.b16 %v1427, %v1423
    %v1476 = vpack.c.b16 %v1428, %v1424
    %v1477 = vpack.c.b16 %v1429, %v1425
    %v1478 = vpack.c.b16 %v1434, %v1430
    %v1479 = vpack.c.b16 %v1435, %v1431
    %v1480 = vpack.c.b16 %v1436, %v1432
    %v1481 = vpack.c.b16 %v1437, %v1433
    %v1482 = vpack.c.b16 %v1442, %v1438
    %v1483 = vpack.c.b16 %v1443, %v1439
    %v1484 = vpack.c.b16 %v1444, %v1440
    %v1485 = vpack.c.b16 %v1445, %v1441
    %v1486 = vpack.c.b16 %v1450, %v1446
    %v1487 = vpack.c.b16 %v1451, %v1447
    %v1488 = vpack.c.b16 %v1452, %v1448
    %v1489 = vpack.c.b16 %v1453, %v1449
    %v1490 = vpack.c.b16 %v1458, %v1454
    %v1491 = vpack.c.b16 %v1459, %v1455
    %v1492 = vpack.c.b16 %v1460, %v1456
    %v1493 = vpack.c.b16 %v1461, %v1457
    %1526 = vmatprep.subr.bf16.mxu0 %v1463
    %1527 = vmatpush1.bf16.msra.mxu0 %v1462
    %1528 = vmatprep.subr.bf16.mxu0 %v1467
    %1529 = vmatpush1.bf16.msra.mxu0 %v1466
    %1530 = vmatprep.subr.bf16.mxu0 %v1471
    %1531 = vmatpush1.bf16.msra.mxu0 %v1470
    %1532 = vmatprep.subr.bf16.mxu0 %v1475
    %1533 = vmatpush1.bf16.msra.mxu0 %v1474
    %1534 = vmatprep.subr.bf16.mxu0 %v1479
    %1535 = vmatpush1.bf16.msra.mxu0 %v1478
    %1536 = vmatprep.subr.bf16.mxu0 %v1483
    %1537 = vmatpush1.bf16.msra.mxu0 %v1482
    %1538 = vmatprep.subr.bf16.mxu0 %v1487
    %1539 = vmatpush1.bf16.msra.mxu0 %v1486
    %1540 = vmatprep.subr.bf16.mxu0 %v1491
    %1541 = vmatpush1.bf16.msra.mxu0 %v1490
    %1542 = vmatprep.subr.bf16.mxu0 0
    %1543 = vmatpush1.bf16.msra.mxu0 0
    %1544 = vmatprep.subr.bf16.mxu0 0
    %1545 = vmatpush1.bf16.msra.mxu0 0
    %1546 = vmatprep.subr.bf16.mxu0 0
    %1547 = vmatpush1.bf16.msra.mxu0 0
    %1548 = vmatprep.subr.bf16.mxu0 0
    %1549 = vmatpush1.bf16.msra.mxu0 0
    %1550 = vmatprep.subr.bf16.mxu0 0
    %1551 = vmatpush1.bf16.msra.mxu0 0
    %1552 = vmatprep.subr.bf16.mxu0 0
    %1553 = vmatpush1.bf16.msra.mxu0 0
    %1554 = vmatprep.subr.bf16.mxu0 0
    %1555 = vmatpush1.bf16.msra.mxu0 0
    %1556 = vmatprep.subr.bf16.mxu0 0
    %1557 = vmatpush1.bf16.msra.mxu0 0
    %1558 = vmatprep.mubr.bf16.mxu0 0
    %1559 = vmatmul.mubr.bf16.gmra.mrb[0].mxu0 %v1311
    %v1560 = vpop.f32.mrb[0].mxu0
    %v1561 = vadd.f32 %v1349, %v1560
    %v1562 = vpop.f32.mrb[0].mxu0
    %v1563 = vadd.f32 %v1353, %v1562
    %v1564 = vpop.f32.mrb[0].mxu0
    %v1565 = vpop.f32.mrb[0].mxu0
    %1566 = vdwg.mxu0
    %1567 = vmatprep.subr.bf16.mxu0 %v1465
    %1568 = vmatpush1.bf16.msra.mxu0 %v1464
    %1569 = vmatprep.subr.bf16.mxu0 %v1469
    %1570 = vmatpush1.bf16.msra.mxu0 %v1468
    %1571 = vmatprep.subr.bf16.mxu0 %v1473
    %1572 = vmatpush1.bf16.msra.mxu0 %v1472
    %1573 = vmatprep.subr.bf16.mxu0 %v1477
    %1574 = vmatpush1.bf16.msra.mxu0 %v1476
    %1575 = vmatprep.subr.bf16.mxu0 %v1481
    %1576 = vmatpush1.bf16.msra.mxu0 %v1480
    %1577 = vmatprep.subr.bf16.mxu0 %v1485
    %1578 = vmatpush1.bf16.msra.mxu0 %v1484
    %1579 = vmatprep.subr.bf16.mxu0 %v1489
    %1580 = vmatpush1.bf16.msra.mxu0 %v1488
    %1581 = vmatprep.subr.bf16.mxu0 %v1493
    %1582 = vmatpush1.bf16.msra.mxu0 %v1492
    %1583 = vmatprep.subr.bf16.mxu0 0
    %1584 = vmatpush1.bf16.msra.mxu0 0
    %1585 = vmatprep.subr.bf16.mxu0 0
    %1586 = vmatpush1.bf16.msra.mxu0 0
    %1587 = vmatprep.subr.bf16.mxu0 0
    %1588 = vmatpush1.bf16.msra.mxu0 0
    %1589 = vmatprep.subr.bf16.mxu0 0
    %1590 = vmatpush1.bf16.msra.mxu0 0
    %1591 = vmatprep.subr.bf16.mxu0 0
    %1592 = vmatpush1.bf16.msra.mxu0 0
    %1593 = vmatprep.subr.bf16.mxu0 0
    %1594 = vmatpush1.bf16.msra.mxu0 0
    %1595 = vmatprep.subr.bf16.mxu0 0
    %1596 = vmatpush1.bf16.msra.mxu0 0
    %1597 = vmatprep.subr.bf16.mxu0 0
    %1598 = vmatpush1.bf16.msra.mxu0 0
    %1599 = vmatprep.mubr.bf16.mxu0 0
    %1600 = vmatmul.mubr.bf16.gmra.mrb[0].mxu0 %v1311
    %v1601 = vpop.f32.mrb[0].mxu0
    %v1602 = vadd.f32 %v1357, %v1601
    %v1603 = vpop.f32.mrb[0].mxu0
    %v1604 = vadd.f32 %v1361, %v1603
    %v1605 = vpop.f32.mrb[0].mxu0
    %v1606 = vpop.f32.mrb[0].mxu0
    %1607 = vdwg.mxu0
    %1608 = vst [vmem:[#allocation10] sm:$0xff] %v1561
    %1609 = vst [vmem:[#allocation10 + $0x8] sm:$0xff] %v1563
    %1610 = vst [vmem:[#allocation10 + $0x10] sm:$0xff] %v1602
    %1611 = vst [vmem:[#allocation10 + $0x18] sm:$0xff] %v1604
    // Predicated region
    $region42: #{tpu_custom_call.1} parent=1 // pred_check
      _
    $region43: #{tpu_custom_call.1} parent=1 // pred_check_branch
      %1613 = sbr.rel (0) target = $region45
    $region44: #{tpu_custom_call.1} parent=1 // pred_region
      %s1615 = ssub.s32 512, 512
      %1616 = vsyncadd [#allocation4], %s1615
      %s1618 = sshll.u32 [#allocation10], 4
      %s1619 = int_to_ptr.vmem [resolvable:$true] %s1618
      %1621 = dma.vmem_to_hbm [thread:$0]  %s1619, 512, %s6, [#allocation4]
    $region45: #{tpu_custom_call.1} parent=1 // pred_fallthru
      _
    // Predicated region
    $region46: #{tpu_custom_call.1} parent=1 // pred_check
      _
    $region47: #{tpu_custom_call.1} parent=1 // pred_check_branch
      %1623 = sbr.rel (0) target = $region49
    $region48: #{tpu_custom_call.1} parent=1 // pred_region
      %1624 = dma.done [#allocation4], 512
    $region49: #{tpu_custom_call.1} parent=1 // pred_fallthru
      _
    %1625 = vsyncpa [#allocation3], 1
    %1626 = vsyncpa [#allocation6], 1
    %1627 = vsyncpa [#allocation9], 1
    %1628 = vsyncpa [#allocation4], 1

</llo_original>
